<compile_context>
chip_gen: v7x
topology: tpu7x:2x2x1
jax: 0.10.0
libtpu: 0.0.40
codegen_flags: <defaults>
</compile_context>

<pallas_src>
import jax
import jax.numpy as jnp
from jax.experimental import pallas as pl
from jax.experimental.pallas import tpu as pltpu


# ----------------------------------------------------------------------------
# helpers
# ----------------------------------------------------------------------------
def _fold_bn(gamma, beta, mean, var, eps=1e-5):
    scale = gamma / jnp.sqrt(var + eps)
    bias = beta - mean * scale
    return scale, bias


def _make_kernel(Cin, Cinter, Co, H, W, LPAD):
    P = H * W

    def kernel(x_ref, w1t_ref, w2f_ref, s1_ref, b1_ref, s2_ref, b2_ref,
               m_ref, o_ref, hpad_ref, col_ref):
        # ---- load input slab (Cin, P) and write the passthrough channels ----
        x = x_ref[0]                                        # (Cin, P) f32
        o_ref[0, 0:Cin, :] = x

        # ---- bn1 (folded) + relu, then 1x1 conv on the MXU (bf16 in, f32 acc)
        h0 = jnp.maximum(x * s1_ref[...] + b1_ref[...], 0.0)
        h1 = jnp.dot(w1t_ref[...], h0.astype(jnp.bfloat16),
                     preferred_element_type=jnp.float32)    # (Cinter, P)

        # ---- bn2 (folded) + relu ----
        h = jnp.maximum(h1 * s2_ref[...] + b2_ref[...], 0.0)

        # ---- stage h into a zero-padded flat spatial buffer so each of the
        #      25 conv taps becomes a static lane-window read (flat shift) ----
        hpad_ref[...] = jnp.zeros_like(hpad_ref)
        hpad_ref[:, LPAD:LPAD + P] = h                      # aligned store

        # per-dx column-validity masks, hoisted out of the tap loop
        mrows = [m_ref[dx:dx + 1, :] for dx in range(5)]    # each (1, P)

        # ---- im2col: 25 shifted + masked copies -> (25*Cinter, P) bf16 ------
        for dy in range(5):
            for dx in range(5):
                shift = (dy - 2) * W + (dx - 2)
                patch = hpad_ref[:, LPAD + shift:LPAD + shift + P]  # (Cinter,P)
                if dx != 2:                                 # dx == 2: all-ones
                    patch = patch * mrows[dx]
                tap = 5 * dy + dx
                col_ref[tap * Cinter:(tap + 1) * Cinter, :] = (
                    patch.astype(jnp.bfloat16))

        # ---- 5x5 conv: a single K = 25*Cinter matmul, lane-dense output -----
        conv = jnp.dot(w2f_ref[...], col_ref[...],
                       preferred_element_type=jnp.float32)  # (Co, P)
        o_ref[0, Cin:Cin + Co, :] = conv

    return kernel


# ----------------------------------------------------------------------------
# Module wrapper
# ----------------------------------------------------------------------------
@jax.jit
def bottleneck_block1(x_nchw, params):
    """x_nchw: (N, in_planes, H, W) -> (N, in_planes + out_planes, H, W)."""
    N, Cin, H, W = x_nchw.shape
    Cinter = params["w1"].shape[1]
    Co = params["w2"].shape[3]
    P = H * W
    LPAD = ((2 * W + 2 + 127) // 128) * 128       # lane-aligned left padding
    PPAD = LPAD + P + 2 * W + 2                   # padded flat spatial length

    s1, b1 = _fold_bn(params["bn1_gamma"], params["bn1_beta"],
                      params["bn1_mean"], params["bn1_var"])
    s2, b2 = _fold_bn(params["bn2_gamma"], params["bn2_beta"],
                      params["bn2_mean"], params["bn2_var"])

    # glue: free reshapes only (no transposes / pads of the activation)
    x3 = x_nchw.reshape(N, Cin, P).astype(jnp.float32)

    # weights: (Cinter, Cin) and (Co, 25*Cinter), cast to bf16 once
    w1t = jnp.transpose(params["w1"], (1, 0)).astype(jnp.bfloat16)
    w2f = jnp.transpose(params["w2"], (3, 0, 1, 2)).reshape(
        Co, 25 * Cinter).astype(jnp.bfloat16)

    # x-direction validity masks (0/1) for the 5 horizontal tap offsets
    xs = jnp.arange(P, dtype=jnp.int32) % W
    xmask = jnp.stack(
        [((xs + (dx - 2) >= 0) & (xs + (dx - 2) < W)).astype(jnp.float32)
         for dx in range(5)], axis=0)             # (5, P)

    kernel = _make_kernel(Cin, Cinter, Co, H, W, LPAD)

    out3 = pl.pallas_call(
        kernel,
        out_shape=jax.ShapeDtypeStruct((N, Cin + Co, P), jnp.float32),
        grid_spec=pltpu.PrefetchScalarGridSpec(
            num_scalar_prefetch=0,
            grid=(N,),
            in_specs=[
                pl.BlockSpec((1, Cin, P), lambda n: (n, 0, 0)),        # x
                pl.BlockSpec((Cinter, Cin), lambda n: (0, 0)),         # w1^T
                pl.BlockSpec((Co, 25 * Cinter), lambda n: (0, 0)),     # w2 flat
                pl.BlockSpec((Cin, 1), lambda n: (0, 0)),              # s1
                pl.BlockSpec((Cin, 1), lambda n: (0, 0)),              # b1
                pl.BlockSpec((Cinter, 1), lambda n: (0, 0)),           # s2
                pl.BlockSpec((Cinter, 1), lambda n: (0, 0)),           # b2
                pl.BlockSpec((5, P), lambda n: (0, 0)),                # xmask
            ],
            out_specs=pl.BlockSpec((1, Cin + Co, P), lambda n: (n, 0, 0)),
            scratch_shapes=[
                pltpu.VMEM((Cinter, PPAD), jnp.float32),        # padded h
                pltpu.VMEM((25 * Cinter, P), jnp.bfloat16),     # im2col
            ],
        ),
        compiler_params=pltpu.CompilerParams(
            dimension_semantics=("parallel",)),
    )(x3, w1t, w2f,
      s1.reshape(Cin, 1), b1.reshape(Cin, 1),
      s2.reshape(Cinter, 1), b2.reshape(Cinter, 1),
      xmask)

    return out3.reshape(N, Cin + Co, H, W)


# ----------------------------------------------------------------------------
# Parameters (matching the PyTorch module's tensors)
# ----------------------------------------------------------------------------
def init_params(key, in_planes, out_planes):
    inter = out_planes * 4
    ks = jax.random.split(key, 10)
    return {
        # conv1: torch (inter, in, 1, 1) -> stored as (in, inter)
        "w1": jax.random.normal(ks[0], (in_planes, inter), jnp.float32) * 0.1,
        # conv2: torch (out, inter, 5, 5) -> stored as (5, 5, inter, out)
        "w2": jax.random.normal(ks[1], (5, 5, inter, out_planes),
                                jnp.float32) * 0.05,
        "bn1_gamma": jax.random.normal(ks[2], (in_planes,), jnp.float32) * 0.1 + 1.0,
        "bn1_beta": jax.random.normal(ks[3], (in_planes,), jnp.float32) * 0.1,
        "bn1_mean": jax.random.normal(ks[4], (in_planes,), jnp.float32) * 0.1,
        "bn1_var": jax.random.uniform(ks[5], (in_planes,), jnp.float32, 0.5, 1.5),
        "bn2_gamma": jax.random.normal(ks[6], (inter,), jnp.float32) * 0.1 + 1.0,
        "bn2_beta": jax.random.normal(ks[7], (inter,), jnp.float32) * 0.1,
        "bn2_mean": jax.random.normal(ks[8], (inter,), jnp.float32) * 0.1,
        "bn2_var": jax.random.uniform(ks[9], (inter,), jnp.float32, 0.5, 1.5),
    }


# ----------------------------------------------------------------------------
# Pure-JAX reference (correctness check only)
# ----------------------------------------------------------------------------
def reference(x_nchw, params, eps=1e-5):
    def bn(x, g, b, m, v):
        return (x - m[None, :, None, None]) / jnp.sqrt(v[None, :, None, None] + eps) \
            * g[None, :, None, None] + b[None, :, None, None]

    h = jax.nn.relu(bn(x_nchw, params["bn1_gamma"], params["bn1_beta"],
                       params["bn1_mean"], params["bn1_var"]))
    w1_oihw = jnp.transpose(params["w1"], (1, 0))[:, :, None, None]
    h = jax.lax.conv_general_dilated(h, w1_oihw, (1, 1), [(0, 0), (0, 0)],
                                     dimension_numbers=("NCHW", "OIHW", "NCHW"))
    h = jax.nn.relu(bn(h, params["bn2_gamma"], params["bn2_beta"],
                       params["bn2_mean"], params["bn2_var"]))
    w2_oihw = jnp.transpose(params["w2"], (3, 2, 0, 1))
    out = jax.lax.conv_general_dilated(h, w2_oihw, (1, 1), [(2, 2), (2, 2)],
                                       dimension_numbers=("NCHW", "OIHW", "NCHW"))
    return jnp.concatenate([x_nchw, out], axis=1)


if __name__ == "__main__":
    key = jax.random.PRNGKey(0)
    k_x, k_p = jax.random.split(key)

    N, in_planes, H, W = 2, 4, 16, 16
    out_planes = 4  # inter_planes = 16

    x = jax.random.normal(k_x, (N, in_planes, H, W), jnp.float32)
    params = init_params(k_p, in_planes, out_planes)

    y = bottleneck_block1(x, params)
    y = jax.block_until_ready(y)

    assert y.shape == (N, in_planes + out_planes, H, W), y.shape

    y_ref = reference(x, params)
    max_err = float(jnp.max(jnp.abs(y - y_ref)))
    # bf16 matmul operands (f32 accumulate) vs. the all-f32 reference.
    assert jnp.allclose(y, y_ref, atol=2e-2, rtol=2e-2), max_err

    print("KERNEL_OK")
</pallas_src>

<mosaic_0001>
module attributes {stable_mosaic.version = 11 : i64} {
  func.func @kernel(%arg0: i32, %arg1: memref<1x4x256xf32, #tpu.memory_space<vmem>>, %arg2: memref<16x4xbf16, #tpu.memory_space<vmem>>, %arg3: memref<4x400xbf16, #tpu.memory_space<vmem>>, %arg4: memref<4x1xf32, #tpu.memory_space<vmem>>, %arg5: memref<4x1xf32, #tpu.memory_space<vmem>>, %arg6: memref<16x1xf32, #tpu.memory_space<vmem>>, %arg7: memref<16x1xf32, #tpu.memory_space<vmem>>, %arg8: memref<5x256xf32, #tpu.memory_space<vmem>>, %arg9: memref<1x8x256xf32, #tpu.memory_space<vmem>>, %arg10: memref<16x418xf32, #tpu.memory_space<vmem>>, %arg11: memref<400x256xbf16, #tpu.memory_space<vmem>>) attributes {dimension_semantics = [#tpu.dimension_semantics<parallel>], iteration_bounds = array<i64: 2>, scalar_prefetch = 0 : i64, scratch_operands = 2 : i64, tpu.core_type = #tpu.core_type<tc>, window_params = [{transform_indices = @transform_0, window_bounds = array<i64: 1, 4, 256>}, {pipeline_mode = #tpu.pipeline_mode<synchronous>, transform_indices = @transform_1, window_bounds = array<i64: 16, 4>}, {pipeline_mode = #tpu.pipeline_mode<synchronous>, transform_indices = @transform_2, window_bounds = array<i64: 4, 400>}, {pipeline_mode = #tpu.pipeline_mode<synchronous>, transform_indices = @transform_3, window_bounds = array<i64: 4, 1>}, {pipeline_mode = #tpu.pipeline_mode<synchronous>, transform_indices = @transform_4, window_bounds = array<i64: 4, 1>}, {pipeline_mode = #tpu.pipeline_mode<synchronous>, transform_indices = @transform_5, window_bounds = array<i64: 16, 1>}, {pipeline_mode = #tpu.pipeline_mode<synchronous>, transform_indices = @transform_6, window_bounds = array<i64: 16, 1>}, {pipeline_mode = #tpu.pipeline_mode<synchronous>, transform_indices = @transform_7, window_bounds = array<i64: 5, 256>}, {transform_indices = @transform_8, window_bounds = array<i64: 1, 8, 256>}]} {
    %c0 = arith.constant 0 : index
    %c0_0 = arith.constant 0 : index
    %c0_1 = arith.constant 0 : index
    %0 = vector.load %arg1[%c0, %c0_0, %c0_1] : memref<1x4x256xf32, #tpu.memory_space<vmem>>, vector<1x4x256xf32>
    %1 = vector.shape_cast %0 : vector<1x4x256xf32> to vector<4x256xf32>
    %c0_2 = arith.constant 0 : index
    %c0_3 = arith.constant 0 : index
    %c0_4 = arith.constant 0 : index
    %2 = vector.load %arg9[%c0_2, %c0_3, %c0_4] : memref<1x8x256xf32, #tpu.memory_space<vmem>>, vector<1x4x256xf32>
    %3 = vector.shape_cast %2 : vector<1x4x256xf32> to vector<4x256xf32>
    %4 = vector.shape_cast %1 : vector<4x256xf32> to vector<1x4x256xf32>
    tpu.vector_store %arg9[%c0_2, %c0_3, %c0_4], %4 {strides = array<i32>} : memref<1x8x256xf32, #tpu.memory_space<vmem>>, vector<1x4x256xf32>,
    %c0_5 = arith.constant 0 : index
    %c0_6 = arith.constant 0 : index
    %5 = vector.load %arg4[%c0_5, %c0_6] : memref<4x1xf32, #tpu.memory_space<vmem>>, vector<4x1xf32>
    %6 = vector.broadcast %5 : vector<4x1xf32> to vector<4x256xf32>
    %7 = arith.mulf %1, %6 : vector<4x256xf32>
    %c0_7 = arith.constant 0 : index
    %c0_8 = arith.constant 0 : index
    %8 = vector.load %arg5[%c0_7, %c0_8] : memref<4x1xf32, #tpu.memory_space<vmem>>, vector<4x1xf32>
    %9 = vector.broadcast %8 : vector<4x1xf32> to vector<4x256xf32>
    %10 = arith.addf %7, %9 : vector<4x256xf32>
    %cst = arith.constant 0.000000e+00 : f32
    %11 = vector.broadcast %cst : f32 to vector<4x256xf32>
    %12 = arith.maximumf %10, %11 : vector<4x256xf32>
    %c0_9 = arith.constant 0 : index
    %c0_10 = arith.constant 0 : index
    %13 = vector.load %arg2[%c0_9, %c0_10] : memref<16x4xbf16, #tpu.memory_space<vmem>>, vector<16x4xbf16>
    %14 = arith.truncf %12 : vector<4x256xf32> to vector<4x256xbf16>
    %cst_11 = arith.constant dense<0.000000e+00> : vector<16x256xf32>
    %15 = tpu.matmul %13, %14, %cst_11 {dimension_numbers = #tpu.dot_dimension_numbers<[1], [0], [0], [1], [0, 0, 1, 1], [], []>} : vector<16x4xbf16>, vector<4x256xbf16>, vector<16x256xf32> -> vector<16x256xf32>
    %c0_12 = arith.constant 0 : index
    %c0_13 = arith.constant 0 : index
    %16 = vector.load %arg6[%c0_12, %c0_13] : memref<16x1xf32, #tpu.memory_space<vmem>>, vector<16x1xf32>
    %17 = vector.broadcast %16 : vector<16x1xf32> to vector<16x256xf32>
    %18 = arith.mulf %15, %17 : vector<16x256xf32>
    %c0_14 = arith.constant 0 : index
    %c0_15 = arith.constant 0 : index
    %19 = vector.load %arg7[%c0_14, %c0_15] : memref<16x1xf32, #tpu.memory_space<vmem>>, vector<16x1xf32>
    %20 = vector.broadcast %19 : vector<16x1xf32> to vector<16x256xf32>
    %21 = arith.addf %18, %20 : vector<16x256xf32>
    %cst_16 = arith.constant 0.000000e+00 : f32
    %22 = vector.broadcast %cst_16 : f32 to vector<16x256xf32>
    %23 = arith.maximumf %21, %22 : vector<16x256xf32>
    %cst_17 = arith.constant 0.000000e+00 : f32
    %24 = vector.broadcast %cst_17 : f32 to vector<16x418xf32>
    %c0_18 = arith.constant 0 : index
    %c0_19 = arith.constant 0 : index
    %25 = vector.load %arg10[%c0_18, %c0_19] : memref<16x418xf32, #tpu.memory_space<vmem>>, vector<16x418xf32>
    tpu.vector_store %arg10[%c0_18, %c0_19], %24 {strides = array<i32>} : memref<16x418xf32, #tpu.memory_space<vmem>>, vector<16x418xf32>,
    %c0_20 = arith.constant 0 : index
    %c128 = arith.constant 128 : index
    %26 = vector.load %arg10[%c0_20, %c128] : memref<16x418xf32, #tpu.memory_space<vmem>>, vector<16x256xf32>
    tpu.vector_store %arg10[%c0_20, %c128], %23 {strides = array<i32>} : memref<16x418xf32, #tpu.memory_space<vmem>>, vector<16x256xf32>,
    %c0_21 = arith.constant 0 : index
    %c0_22 = arith.constant 0 : index
    %27 = vector.load %arg8[%c0_21, %c0_22] : memref<5x256xf32, #tpu.memory_space<vmem>>, vector<1x256xf32>
    %c1 = arith.constant 1 : index
    %c0_23 = arith.constant 0 : index
    %28 = vector.load %arg8[%c1, %c0_23] : memref<5x256xf32, #tpu.memory_space<vmem>>, vector<1x256xf32>
    %c3 = arith.constant 3 : index
    %c0_24 = arith.constant 0 : index
    %29 = vector.load %arg8[%c3, %c0_24] : memref<5x256xf32, #tpu.memory_space<vmem>>, vector<1x256xf32>
    %c4 = arith.constant 4 : index
    %c0_25 = arith.constant 0 : index
    %30 = vector.load %arg8[%c4, %c0_25] : memref<5x256xf32, #tpu.memory_space<vmem>>, vector<1x256xf32>
    %c0_26 = arith.constant 0 : index
    %c94 = arith.constant 94 : index
    %31 = vector.load %arg10[%c0_26, %c94] : memref<16x418xf32, #tpu.memory_space<vmem>>, vector<16x256xf32>
    %32 = vector.broadcast %27 : vector<1x256xf32> to vector<16x256xf32>
    %33 = arith.mulf %31, %32 : vector<16x256xf32>
    %34 = arith.truncf %33 : vector<16x256xf32> to vector<16x256xbf16>
    %c0_27 = arith.constant 0 : index
    %c0_28 = arith.constant 0 : index
    %35 = vector.load %arg11[%c0_27, %c0_28] : memref<400x256xbf16, #tpu.memory_space<vmem>>, vector<16x256xbf16>
    tpu.vector_store %arg11[%c0_27, %c0_28], %34 {strides = array<i32>} : memref<400x256xbf16, #tpu.memory_space<vmem>>, vector<16x256xbf16>,
    %c0_29 = arith.constant 0 : index
    %c95 = arith.constant 95 : index
    %36 = vector.load %arg10[%c0_29, %c95] : memref<16x418xf32, #tpu.memory_space<vmem>>, vector<16x256xf32>
    %37 = vector.broadcast %28 : vector<1x256xf32> to vector<16x256xf32>
    %38 = arith.mulf %36, %37 : vector<16x256xf32>
    %39 = arith.truncf %38 : vector<16x256xf32> to vector<16x256xbf16>
    %c16 = arith.constant 16 : index
    %c0_30 = arith.constant 0 : index
    %40 = vector.load %arg11[%c16, %c0_30] : memref<400x256xbf16, #tpu.memory_space<vmem>>, vector<16x256xbf16>
    tpu.vector_store %arg11[%c16, %c0_30], %39 {strides = array<i32>} : memref<400x256xbf16, #tpu.memory_space<vmem>>, vector<16x256xbf16>,
    %c0_31 = arith.constant 0 : index
    %c96 = arith.constant 96 : index
    %41 = vector.load %arg10[%c0_31, %c96] : memref<16x418xf32, #tpu.memory_space<vmem>>, vector<16x256xf32>
    %42 = arith.truncf %41 : vector<16x256xf32> to vector<16x256xbf16>
    %c32 = arith.constant 32 : index
    %c0_32 = arith.constant 0 : index
    %43 = vector.load %arg11[%c32, %c0_32] : memref<400x256xbf16, #tpu.memory_space<vmem>>, vector<16x256xbf16>
    tpu.vector_store %arg11[%c32, %c0_32], %42 {strides = array<i32>} : memref<400x256xbf16, #tpu.memory_space<vmem>>, vector<16x256xbf16>,
    %c0_33 = arith.constant 0 : index
    %c97 = arith.constant 97 : index
    %44 = vector.load %arg10[%c0_33, %c97] : memref<16x418xf32, #tpu.memory_space<vmem>>, vector<16x256xf32>
    %45 = vector.broadcast %29 : vector<1x256xf32> to vector<16x256xf32>
    %46 = arith.mulf %44, %45 : vector<16x256xf32>
    %47 = arith.truncf %46 : vector<16x256xf32> to vector<16x256xbf16>
    %c48 = arith.constant 48 : index
    %c0_34 = arith.constant 0 : index
    %48 = vector.load %arg11[%c48, %c0_34] : memref<400x256xbf16, #tpu.memory_space<vmem>>, vector<16x256xbf16>
    tpu.vector_store %arg11[%c48, %c0_34], %47 {strides = array<i32>} : memref<400x256xbf16, #tpu.memory_space<vmem>>, vector<16x256xbf16>,
    %c0_35 = arith.constant 0 : index
    %c98 = arith.constant 98 : index
    %49 = vector.load %arg10[%c0_35, %c98] : memref<16x418xf32, #tpu.memory_space<vmem>>, vector<16x256xf32>
    %50 = vector.broadcast %30 : vector<1x256xf32> to vector<16x256xf32>
    %51 = arith.mulf %49, %50 : vector<16x256xf32>
    %52 = arith.truncf %51 : vector<16x256xf32> to vector<16x256xbf16>
    %c64 = arith.constant 64 : index
    %c0_36 = arith.constant 0 : index
    %53 = vector.load %arg11[%c64, %c0_36] : memref<400x256xbf16, #tpu.memory_space<vmem>>, vector<16x256xbf16>
    tpu.vector_store %arg11[%c64, %c0_36], %52 {strides = array<i32>} : memref<400x256xbf16, #tpu.memory_space<vmem>>, vector<16x256xbf16>,
    %c0_37 = arith.constant 0 : index
    %c110 = arith.constant 110 : index
    %54 = vector.load %arg10[%c0_37, %c110] : memref<16x418xf32, #tpu.memory_space<vmem>>, vector<16x256xf32>
    %55 = vector.broadcast %27 : vector<1x256xf32> to vector<16x256xf32>
    %56 = arith.mulf %54, %55 : vector<16x256xf32>
    %57 = arith.truncf %56 : vector<16x256xf32> to vector<16x256xbf16>
    %c80 = arith.constant 80 : index
    %c0_38 = arith.constant 0 : index
    %58 = vector.load %arg11[%c80, %c0_38] : memref<400x256xbf16, #tpu.memory_space<vmem>>, vector<16x256xbf16>
    tpu.vector_store %arg11[%c80, %c0_38], %57 {strides = array<i32>} : memref<400x256xbf16, #tpu.memory_space<vmem>>, vector<16x256xbf16>,
    %c0_39 = arith.constant 0 : index
    %c111 = arith.constant 111 : index
    %59 = vector.load %arg10[%c0_39, %c111] : memref<16x418xf32, #tpu.memory_space<vmem>>, vector<16x256xf32>
    %60 = vector.broadcast %28 : vector<1x256xf32> to vector<16x256xf32>
    %61 = arith.mulf %59, %60 : vector<16x256xf32>
    %62 = arith.truncf %61 : vector<16x256xf32> to vector<16x256xbf16>
    %c96_40 = arith.constant 96 : index
    %c0_41 = arith.constant 0 : index
    %63 = vector.load %arg11[%c96_40, %c0_41] : memref<400x256xbf16, #tpu.memory_space<vmem>>, vector<16x256xbf16>
    tpu.vector_store %arg11[%c96_40, %c0_41], %62 {strides = array<i32>} : memref<400x256xbf16, #tpu.memory_space<vmem>>, vector<16x256xbf16>,
    %c0_42 = arith.constant 0 : index
    %c112 = arith.constant 112 : index
    %64 = vector.load %arg10[%c0_42, %c112] : memref<16x418xf32, #tpu.memory_space<vmem>>, vector<16x256xf32>
    %65 = arith.truncf %64 : vector<16x256xf32> to vector<16x256xbf16>
    %c112_43 = arith.constant 112 : index
    %c0_44 = arith.constant 0 : index
    %66 = vector.load %arg11[%c112_43, %c0_44] : memref<400x256xbf16, #tpu.memory_space<vmem>>, vector<16x256xbf16>
    tpu.vector_store %arg11[%c112_43, %c0_44], %65 {strides = array<i32>} : memref<400x256xbf16, #tpu.memory_space<vmem>>, vector<16x256xbf16>,
    %c0_45 = arith.constant 0 : index
    %c113 = arith.constant 113 : index
    %67 = vector.load %arg10[%c0_45, %c113] : memref<16x418xf32, #tpu.memory_space<vmem>>, vector<16x256xf32>
    %68 = vector.broadcast %29 : vector<1x256xf32> to vector<16x256xf32>
    %69 = arith.mulf %67, %68 : vector<16x256xf32>
    %70 = arith.truncf %69 : vector<16x256xf32> to vector<16x256xbf16>
    %c128_46 = arith.constant 128 : index
    %c0_47 = arith.constant 0 : index
    %71 = vector.load %arg11[%c128_46, %c0_47] : memref<400x256xbf16, #tpu.memory_space<vmem>>, vector<16x256xbf16>
    tpu.vector_store %arg11[%c128_46, %c0_47], %70 {strides = array<i32>} : memref<400x256xbf16, #tpu.memory_space<vmem>>, vector<16x256xbf16>,
    %c0_48 = arith.constant 0 : index
    %c114 = arith.constant 114 : index
    %72 = vector.load %arg10[%c0_48, %c114] : memref<16x418xf32, #tpu.memory_space<vmem>>, vector<16x256xf32>
    %73 = vector.broadcast %30 : vector<1x256xf32> to vector<16x256xf32>
    %74 = arith.mulf %72, %73 : vector<16x256xf32>
    %75 = arith.truncf %74 : vector<16x256xf32> to vector<16x256xbf16>
    %c144 = arith.constant 144 : index
    %c0_49 = arith.constant 0 : index
    %76 = vector.load %arg11[%c144, %c0_49] : memref<400x256xbf16, #tpu.memory_space<vmem>>, vector<16x256xbf16>
    tpu.vector_store %arg11[%c144, %c0_49], %75 {strides = array<i32>} : memref<400x256xbf16, #tpu.memory_space<vmem>>, vector<16x256xbf16>,
    %c0_50 = arith.constant 0 : index
    %c126 = arith.constant 126 : index
    %77 = vector.load %arg10[%c0_50, %c126] : memref<16x418xf32, #tpu.memory_space<vmem>>, vector<16x256xf32>
    %78 = vector.broadcast %27 : vector<1x256xf32> to vector<16x256xf32>
    %79 = arith.mulf %77, %78 : vector<16x256xf32>
    %80 = arith.truncf %79 : vector<16x256xf32> to vector<16x256xbf16>
    %c160 = arith.constant 160 : index
    %c0_51 = arith.constant 0 : index
    %81 = vector.load %arg11[%c160, %c0_51] : memref<400x256xbf16, #tpu.memory_space<vmem>>, vector<16x256xbf16>
    tpu.vector_store %arg11[%c160, %c0_51], %80 {strides = array<i32>} : memref<400x256xbf16, #tpu.memory_space<vmem>>, vector<16x256xbf16>,
    %c0_52 = arith.constant 0 : index
    %c127 = arith.constant 127 : index
    %82 = vector.load %arg10[%c0_52, %c127] : memref<16x418xf32, #tpu.memory_space<vmem>>, vector<16x256xf32>
    %83 = vector.broadcast %28 : vector<1x256xf32> to vector<16x256xf32>
    %84 = arith.mulf %82, %83 : vector<16x256xf32>
    %85 = arith.truncf %84 : vector<16x256xf32> to vector<16x256xbf16>
    %c176 = arith.constant 176 : index
    %c0_53 = arith.constant 0 : index
    %86 = vector.load %arg11[%c176, %c0_53] : memref<400x256xbf16, #tpu.memory_space<vmem>>, vector<16x256xbf16>
    tpu.vector_store %arg11[%c176, %c0_53], %85 {strides = array<i32>} : memref<400x256xbf16, #tpu.memory_space<vmem>>, vector<16x256xbf16>,
    %c0_54 = arith.constant 0 : index
    %c128_55 = arith.constant 128 : index
    %87 = vector.load %arg10[%c0_54, %c128_55] : memref<16x418xf32, #tpu.memory_space<vmem>>, vector<16x256xf32>
    %88 = arith.truncf %87 : vector<16x256xf32> to vector<16x256xbf16>
    %c192 = arith.constant 192 : index
    %c0_56 = arith.constant 0 : index
    %89 = vector.load %arg11[%c192, %c0_56] : memref<400x256xbf16, #tpu.memory_space<vmem>>, vector<16x256xbf16>
    tpu.vector_store %arg11[%c192, %c0_56], %88 {strides = array<i32>} : memref<400x256xbf16, #tpu.memory_space<vmem>>, vector<16x256xbf16>,
    %c0_57 = arith.constant 0 : index
    %c129 = arith.constant 129 : index
    %90 = vector.load %arg10[%c0_57, %c129] : memref<16x418xf32, #tpu.memory_space<vmem>>, vector<16x256xf32>
    %91 = vector.broadcast %29 : vector<1x256xf32> to vector<16x256xf32>
    %92 = arith.mulf %90, %91 : vector<16x256xf32>
    %93 = arith.truncf %92 : vector<16x256xf32> to vector<16x256xbf16>
    %c208 = arith.constant 208 : index
    %c0_58 = arith.constant 0 : index
    %94 = vector.load %arg11[%c208, %c0_58] : memref<400x256xbf16, #tpu.memory_space<vmem>>, vector<16x256xbf16>
    tpu.vector_store %arg11[%c208, %c0_58], %93 {strides = array<i32>} : memref<400x256xbf16, #tpu.memory_space<vmem>>, vector<16x256xbf16>,
    %c0_59 = arith.constant 0 : index
    %c130 = arith.constant 130 : index
    %95 = vector.load %arg10[%c0_59, %c130] : memref<16x418xf32, #tpu.memory_space<vmem>>, vector<16x256xf32>
    %96 = vector.broadcast %30 : vector<1x256xf32> to vector<16x256xf32>
    %97 = arith.mulf %95, %96 : vector<16x256xf32>
    %98 = arith.truncf %97 : vector<16x256xf32> to vector<16x256xbf16>
    %c224 = arith.constant 224 : index
    %c0_60 = arith.constant 0 : index
    %99 = vector.load %arg11[%c224, %c0_60] : memref<400x256xbf16, #tpu.memory_space<vmem>>, vector<16x256xbf16>
    tpu.vector_store %arg11[%c224, %c0_60], %98 {strides = array<i32>} : memref<400x256xbf16, #tpu.memory_space<vmem>>, vector<16x256xbf16>,
    %c0_61 = arith.constant 0 : index
    %c142 = arith.constant 142 : index
    %100 = vector.load %arg10[%c0_61, %c142] : memref<16x418xf32, #tpu.memory_space<vmem>>, vector<16x256xf32>
    %101 = vector.broadcast %27 : vector<1x256xf32> to vector<16x256xf32>
    %102 = arith.mulf %100, %101 : vector<16x256xf32>
    %103 = arith.truncf %102 : vector<16x256xf32> to vector<16x256xbf16>
    %c240 = arith.constant 240 : index
    %c0_62 = arith.constant 0 : index
    %104 = vector.load %arg11[%c240, %c0_62] : memref<400x256xbf16, #tpu.memory_space<vmem>>, vector<16x256xbf16>
    tpu.vector_store %arg11[%c240, %c0_62], %103 {strides = array<i32>} : memref<400x256xbf16, #tpu.memory_space<vmem>>, vector<16x256xbf16>,
    %c0_63 = arith.constant 0 : index
    %c143 = arith.constant 143 : index
    %105 = vector.load %arg10[%c0_63, %c143] : memref<16x418xf32, #tpu.memory_space<vmem>>, vector<16x256xf32>
    %106 = vector.broadcast %28 : vector<1x256xf32> to vector<16x256xf32>
    %107 = arith.mulf %105, %106 : vector<16x256xf32>
    %108 = arith.truncf %107 : vector<16x256xf32> to vector<16x256xbf16>
    %c256 = arith.constant 256 : index
    %c0_64 = arith.constant 0 : index
    %109 = vector.load %arg11[%c256, %c0_64] : memref<400x256xbf16, #tpu.memory_space<vmem>>, vector<16x256xbf16>
    tpu.vector_store %arg11[%c256, %c0_64], %108 {strides = array<i32>} : memref<400x256xbf16, #tpu.memory_space<vmem>>, vector<16x256xbf16>,
    %c0_65 = arith.constant 0 : index
    %c144_66 = arith.constant 144 : index
    %110 = vector.load %arg10[%c0_65, %c144_66] : memref<16x418xf32, #tpu.memory_space<vmem>>, vector<16x256xf32>
    %111 = arith.truncf %110 : vector<16x256xf32> to vector<16x256xbf16>
    %c272 = arith.constant 272 : index
    %c0_67 = arith.constant 0 : index
    %112 = vector.load %arg11[%c272, %c0_67] : memref<400x256xbf16, #tpu.memory_space<vmem>>, vector<16x256xbf16>
    tpu.vector_store %arg11[%c272, %c0_67], %111 {strides = array<i32>} : memref<400x256xbf16, #tpu.memory_space<vmem>>, vector<16x256xbf16>,
    %c0_68 = arith.constant 0 : index
    %c145 = arith.constant 145 : index
    %113 = vector.load %arg10[%c0_68, %c145] : memref<16x418xf32, #tpu.memory_space<vmem>>, vector<16x256xf32>
    %114 = vector.broadcast %29 : vector<1x256xf32> to vector<16x256xf32>
    %115 = arith.mulf %113, %114 : vector<16x256xf32>
    %116 = arith.truncf %115 : vector<16x256xf32> to vector<16x256xbf16>
    %c288 = arith.constant 288 : index
    %c0_69 = arith.constant 0 : index
    %117 = vector.load %arg11[%c288, %c0_69] : memref<400x256xbf16, #tpu.memory_space<vmem>>, vector<16x256xbf16>
    tpu.vector_store %arg11[%c288, %c0_69], %116 {strides = array<i32>} : memref<400x256xbf16, #tpu.memory_space<vmem>>, vector<16x256xbf16>,
    %c0_70 = arith.constant 0 : index
    %c146 = arith.constant 146 : index
    %118 = vector.load %arg10[%c0_70, %c146] : memref<16x418xf32, #tpu.memory_space<vmem>>, vector<16x256xf32>
    %119 = vector.broadcast %30 : vector<1x256xf32> to vector<16x256xf32>
    %120 = arith.mulf %118, %119 : vector<16x256xf32>
    %121 = arith.truncf %120 : vector<16x256xf32> to vector<16x256xbf16>
    %c304 = arith.constant 304 : index
    %c0_71 = arith.constant 0 : index
    %122 = vector.load %arg11[%c304, %c0_71] : memref<400x256xbf16, #tpu.memory_space<vmem>>, vector<16x256xbf16>
    tpu.vector_store %arg11[%c304, %c0_71], %121 {strides = array<i32>} : memref<400x256xbf16, #tpu.memory_space<vmem>>, vector<16x256xbf16>,
    %c0_72 = arith.constant 0 : index
    %c158 = arith.constant 158 : index
    %123 = vector.load %arg10[%c0_72, %c158] : memref<16x418xf32, #tpu.memory_space<vmem>>, vector<16x256xf32>
    %124 = vector.broadcast %27 : vector<1x256xf32> to vector<16x256xf32>
    %125 = arith.mulf %123, %124 : vector<16x256xf32>
    %126 = arith.truncf %125 : vector<16x256xf32> to vector<16x256xbf16>
    %c320 = arith.constant 320 : index
    %c0_73 = arith.constant 0 : index
    %127 = vector.load %arg11[%c320, %c0_73] : memref<400x256xbf16, #tpu.memory_space<vmem>>, vector<16x256xbf16>
    tpu.vector_store %arg11[%c320, %c0_73], %126 {strides = array<i32>} : memref<400x256xbf16, #tpu.memory_space<vmem>>, vector<16x256xbf16>,
    %c0_74 = arith.constant 0 : index
    %c159 = arith.constant 159 : index
    %128 = vector.load %arg10[%c0_74, %c159] : memref<16x418xf32, #tpu.memory_space<vmem>>, vector<16x256xf32>
    %129 = vector.broadcast %28 : vector<1x256xf32> to vector<16x256xf32>
    %130 = arith.mulf %128, %129 : vector<16x256xf32>
    %131 = arith.truncf %130 : vector<16x256xf32> to vector<16x256xbf16>
    %c336 = arith.constant 336 : index
    %c0_75 = arith.constant 0 : index
    %132 = vector.load %arg11[%c336, %c0_75] : memref<400x256xbf16, #tpu.memory_space<vmem>>, vector<16x256xbf16>
    tpu.vector_store %arg11[%c336, %c0_75], %131 {strides = array<i32>} : memref<400x256xbf16, #tpu.memory_space<vmem>>, vector<16x256xbf16>,
    %c0_76 = arith.constant 0 : index
    %c160_77 = arith.constant 160 : index
    %133 = vector.load %arg10[%c0_76, %c160_77] : memref<16x418xf32, #tpu.memory_space<vmem>>, vector<16x256xf32>
    %134 = arith.truncf %133 : vector<16x256xf32> to vector<16x256xbf16>
    %c352 = arith.constant 352 : index
    %c0_78 = arith.constant 0 : index
    %135 = vector.load %arg11[%c352, %c0_78] : memref<400x256xbf16, #tpu.memory_space<vmem>>, vector<16x256xbf16>
    tpu.vector_store %arg11[%c352, %c0_78], %134 {strides = array<i32>} : memref<400x256xbf16, #tpu.memory_space<vmem>>, vector<16x256xbf16>,
    %c0_79 = arith.constant 0 : index
    %c161 = arith.constant 161 : index
    %136 = vector.load %arg10[%c0_79, %c161] : memref<16x418xf32, #tpu.memory_space<vmem>>, vector<16x256xf32>
    %137 = vector.broadcast %29 : vector<1x256xf32> to vector<16x256xf32>
    %138 = arith.mulf %136, %137 : vector<16x256xf32>
    %139 = arith.truncf %138 : vector<16x256xf32> to vector<16x256xbf16>
    %c368 = arith.constant 368 : index
    %c0_80 = arith.constant 0 : index
    %140 = vector.load %arg11[%c368, %c0_80] : memref<400x256xbf16, #tpu.memory_space<vmem>>, vector<16x256xbf16>
    tpu.vector_store %arg11[%c368, %c0_80], %139 {strides = array<i32>} : memref<400x256xbf16, #tpu.memory_space<vmem>>, vector<16x256xbf16>,
    %c0_81 = arith.constant 0 : index
    %c162 = arith.constant 162 : index
    %141 = vector.load %arg10[%c0_81, %c162] : memref<16x418xf32, #tpu.memory_space<vmem>>, vector<16x256xf32>
    %142 = vector.broadcast %30 : vector<1x256xf32> to vector<16x256xf32>
    %143 = arith.mulf %141, %142 : vector<16x256xf32>
    %144 = arith.truncf %143 : vector<16x256xf32> to vector<16x256xbf16>
    %c384 = arith.constant 384 : index
    %c0_82 = arith.constant 0 : index
    %145 = vector.load %arg11[%c384, %c0_82] : memref<400x256xbf16, #tpu.memory_space<vmem>>, vector<16x256xbf16>
    tpu.vector_store %arg11[%c384, %c0_82], %144 {strides = array<i32>} : memref<400x256xbf16, #tpu.memory_space<vmem>>, vector<16x256xbf16>,
    %c0_83 = arith.constant 0 : index
    %c0_84 = arith.constant 0 : index
    %146 = vector.load %arg3[%c0_83, %c0_84] : memref<4x400xbf16, #tpu.memory_space<vmem>>, vector<4x400xbf16>
    %c0_85 = arith.constant 0 : index
    %c0_86 = arith.constant 0 : index
    %147 = vector.load %arg11[%c0_85, %c0_86] : memref<400x256xbf16, #tpu.memory_space<vmem>>, vector<400x256xbf16>
    %cst_87 = arith.constant dense<0.000000e+00> : vector<4x256xf32>
    %148 = tpu.matmul %146, %147, %cst_87 {dimension_numbers = #tpu.dot_dimension_numbers<[1], [0], [0], [1], [0, 0, 1, 1], [], []>} : vector<4x400xbf16>, vector<400x256xbf16>, vector<4x256xf32> -> vector<4x256xf32>
    %c0_88 = arith.constant 0 : index
    %c4_89 = arith.constant 4 : index
    %c0_90 = arith.constant 0 : index
    %149 = vector.load %arg9[%c0_88, %c4_89, %c0_90] : memref<1x8x256xf32, #tpu.memory_space<vmem>>, vector<1x4x256xf32>
    %150 = vector.shape_cast %149 : vector<1x4x256xf32> to vector<4x256xf32>
    %151 = vector.shape_cast %148 : vector<4x256xf32> to vector<1x4x256xf32>
    tpu.vector_store %arg9[%c0_88, %c4_89, %c0_90], %151 {strides = array<i32>} : memref<1x8x256xf32, #tpu.memory_space<vmem>>, vector<1x4x256xf32>,
    return
  }
  func.func @transform_0(%arg0: i32) -> (i32, i32, i32) {
    %c0_i32 = arith.constant 0 : i32
    %c0_i32_0 = arith.constant 0 : i32
    %c0_i32_1 = arith.constant 0 : i32
    return %arg0, %c0_i32, %c0_i32_0 : i32, i32, i32
  }
  func.func @transform_1(%arg0: i32) -> (i32, i32) {
    %c0_i32 = arith.constant 0 : i32
    %c0_i32_0 = arith.constant 0 : i32
    %c0_i32_1 = arith.constant 0 : i32
    return %c0_i32, %c0_i32_0 : i32, i32
  }
  func.func @transform_2(%arg0: i32) -> (i32, i32) {
    %c0_i32 = arith.constant 0 : i32
    %c0_i32_0 = arith.constant 0 : i32
    %c0_i32_1 = arith.constant 0 : i32
    return %c0_i32, %c0_i32_0 : i32, i32
  }
  func.func @transform_3(%arg0: i32) -> (i32, i32) {
    %c0_i32 = arith.constant 0 : i32
    %c0_i32_0 = arith.constant 0 : i32
    %c0_i32_1 = arith.constant 0 : i32
    return %c0_i32, %c0_i32_0 : i32, i32
  }
  func.func @transform_4(%arg0: i32) -> (i32, i32) {
    %c0_i32 = arith.constant 0 : i32
    %c0_i32_0 = arith.constant 0 : i32
    %c0_i32_1 = arith.constant 0 : i32
    return %c0_i32, %c0_i32_0 : i32, i32
  }
  func.func @transform_5(%arg0: i32) -> (i32, i32) {
    %c0_i32 = arith.constant 0 : i32
    %c0_i32_0 = arith.constant 0 : i32
    %c0_i32_1 = arith.constant 0 : i32
    return %c0_i32, %c0_i32_0 : i32, i32
  }
  func.func @transform_6(%arg0: i32) -> (i32, i32) {
    %c0_i32 = arith.constant 0 : i32
    %c0_i32_0 = arith.constant 0 : i32
    %c0_i32_1 = arith.constant 0 : i32
    return %c0_i32, %c0_i32_0 : i32, i32
  }
  func.func @transform_7(%arg0: i32) -> (i32, i32) {
    %c0_i32 = arith.constant 0 : i32
    %c0_i32_0 = arith.constant 0 : i32
    %c0_i32_1 = arith.constant 0 : i32
    return %c0_i32, %c0_i32_0 : i32, i32
  }
  func.func @transform_8(%arg0: i32) -> (i32, i32, i32) {
    %c0_i32 = arith.constant 0 : i32
    %c0_i32_0 = arith.constant 0 : i32
    %c0_i32_1 = arith.constant 0 : i32
    return %arg0, %c0_i32, %c0_i32_0 : i32, i32, i32
  }
}

</mosaic_0001>

<llo_original>
// kernel: bottleneck_block1.1
$region0: #{bottleneck_block1.1}
  #allocation0 [shape = 'u32[]', space=smem, size = 0x4, offset = 0x4, fixed_abs, tag = 'smem constant byte address 0x4 - core index']
  #allocation1 [shape = 'u32[144,128]{1,0:T(1,128)}', space=vmem, size = 0x12000, scoped, tag = 'internal scratch']
  #allocation2 [shape = 'f32[16,418]{1,0:T(8,128)}', space=vmem, size = 0x8000, scoped, tag = 'scratch operand']
  #allocation3 [shape = 'bf16[400,256]{1,0:T(16,128)(2,1)}', space=vmem, size = 0x32000, scoped, tag = 'scratch operand']
  %s0 = inlined_call_operand.vmem [shape: f32[2,4,256], index: 0, kind: input, shape index: {}]
  %s1 = inlined_call_operand.vmem [shape: bf16[16,4], index: 1, kind: input, shape index: {}]
  %s2 = inlined_call_operand.vmem [shape: bf16[4,400], index: 2, kind: input, shape index: {}]
  %s3 = inlined_call_operand.vmem [shape: f32[4,1], index: 3, kind: input, shape index: {}]
  %s4 = inlined_call_operand.vmem [shape: f32[4,1], index: 4, kind: input, shape index: {}]
  %s5 = inlined_call_operand.vmem [shape: f32[16,1], index: 5, kind: input, shape index: {}]
  %s6 = inlined_call_operand.vmem [shape: f32[16,1], index: 6, kind: input, shape index: {}]
  %s7 = inlined_call_operand.vmem [shape: f32[5,256], index: 7, kind: input, shape index: {}]
  %s8 = inlined_call_operand.vmem [shape: f32[2,8,256], index: 8, kind: output, shape index: {}]
  %s9 = sld [smem:[#allocation0]]
  $region65: #{bottleneck_block1.1} parent=0
    _
  %s11 = ssub.s32 1, %s9
  %s12 = scalar_select 0, %s11, %s9
  loop: start=0, step=1, limit=4
  $region2: #{bottleneck_block1.1} parent=0 // loop_pre_header
    _
  $region3: #{bottleneck_block1.1} parent=0 // loop_header
    %s14 = sphi 0, %s18
    %p15 = scmp.ge.s32.totalorder %s14, 4
    %s24 = sphi 0, %s26
    %s27 = sphi 0, %s24
    %s28 = sphi 0, %s27
    %s44 = sphi 0, %s28
    %s48 = sphi 0, %s48
    %s50 = sphi 0, %s48
    %s51 = sphi 0, %s50
    %s65 = sphi 0, %s51
    %s69 = sphi 0, %s69
    %s71 = sphi 0, %s69
    %s72 = sphi 0, %s71
    %s86 = sphi 0, %s72
    %s90 = sphi 0, %s90
    %s92 = sphi 0, %s90
    %s93 = sphi 0, %s92
    %s107 = sphi 0, %s93
    %s111 = sphi 0, %s111
    %s113 = sphi 0, %s111
    %s114 = sphi 0, %s113
    %s128 = sphi 0, %s114
    %s132 = sphi 0, %s132
    %s134 = sphi 0, %s132
    %s135 = sphi 0, %s134
    %s149 = sphi 0, %s135
    %s153 = sphi 0, %s153
    %s155 = sphi 0, %s153
    %s156 = sphi 0, %s155
    %s170 = sphi 0, %s156
    %s174 = sphi 0, %s174
    %s176 = sphi 0, %s174
    %s177 = sphi 0, %s176
    %s191 = sphi 0, %s177
    %s197 = sphi 0, %s199
    %s200 = sphi 0, %s197
    %s201 = sphi 0, %s200
    %s217 = sphi 0, %s201
  $region4: #{bottleneck_block1.1} parent=0 // loop_header_branch
    %17 = sbr.rel (%p15) target = $region8
  $region5: #{bottleneck_block1.1} parent=0 // loop_body
    %s19 = ssub.s32 %s14, 1
    %s20 = ssub.s32 %s14, 2
    %s21 = sadd.s32 %s14, 1
    %s22 = ssub.s32 %s14, %s21
    %p23 = scmp.eq.s32.totalorder %s22, 0
    %s25 = sadd.s32 %s24, 1
    %s26 = scalar_select %p23, %s24, %s25
    %p29 = pneg %p23
    %p30 = scmp.eq.s32.totalorder %s14, 1
    %p31 = por %p29, %p30
    %p32 = scmp.ne.s32.totalorder %s24, %s27
    %p33 = scmp.eq.s32.totalorder %s14, 0
    %p34 = por %p32, %p33
    %p35 = scmp.ne.s32.totalorder %s24, %s27
    %p36 = scmp.eq.s32.totalorder %s19, 1
    %p37 = por %p35, %p36
    %p38 = scmp.ne.s32.totalorder %s27, %s28
    %p39 = scmp.eq.s32.totalorder %s19, 0
    %p40 = por %p38, %p39
    %p41 = scmp.ne.s32.totalorder %s27, %s28
    %p42 = scmp.eq.s32.totalorder %s20, 1
    %p43 = por %p41, %p42
    %p45 = scmp.ne.s32.totalorder %s28, %s44
    %p46 = scmp.eq.s32.totalorder %s20, 0
    %p47 = por %p45, %p46
    %s49 = sadd.s32 %s48, 1
    %p52 = scmp.eq.s32.totalorder %s14, 1
    %p53 = scmp.ne.s32.totalorder %s48, %s50
    %p54 = scmp.eq.s32.totalorder %s14, 0
    %p55 = por %p53, %p54
    %p56 = scmp.ne.s32.totalorder %s48, %s50
    %p57 = scmp.eq.s32.totalorder %s19, 1
    %p58 = por %p56, %p57
    %p59 = scmp.ne.s32.totalorder %s50, %s51
    %p60 = scmp.eq.s32.totalorder %s19, 0
    %p61 = por %p59, %p60
    %p62 = scmp.ne.s32.totalorder %s50, %s51
    %p63 = scmp.eq.s32.totalorder %s20, 1
    %p64 = por %p62, %p63
    %p66 = scmp.ne.s32.totalorder %s51, %s65
    %p67 = scmp.eq.s32.totalorder %s20, 0
    %p68 = por %p66, %p67
    %s70 = sadd.s32 %s69, 1
    %p73 = scmp.eq.s32.totalorder %s14, 1
    %p74 = scmp.ne.s32.totalorder %s69, %s71
    %p75 = scmp.eq.s32.totalorder %s14, 0
    %p76 = por %p74, %p75
    %p77 = scmp.ne.s32.totalorder %s69, %s71
    %p78 = scmp.eq.s32.totalorder %s19, 1
    %p79 = por %p77, %p78
    %p80 = scmp.ne.s32.totalorder %s71, %s72
    %p81 = scmp.eq.s32.totalorder %s19, 0
    %p82 = por %p80, %p81
    %p83 = scmp.ne.s32.totalorder %s71, %s72
    %p84 = scmp.eq.s32.totalorder %s20, 1
    %p85 = por %p83, %p84
    %p87 = scmp.ne.s32.totalorder %s72, %s86
    %p88 = scmp.eq.s32.totalorder %s20, 0
    %p89 = por %p87, %p88
    %s91 = sadd.s32 %s90, 1
    %p94 = scmp.eq.s32.totalorder %s14, 1
    %p95 = scmp.ne.s32.totalorder %s90, %s92
    %p96 = scmp.eq.s32.totalorder %s14, 0
    %p97 = por %p95, %p96
    %p98 = scmp.ne.s32.totalorder %s90, %s92
    %p99 = scmp.eq.s32.totalorder %s19, 1
    %p100 = por %p98, %p99
    %p101 = scmp.ne.s32.totalorder %s92, %s93
    %p102 = scmp.eq.s32.totalorder %s19, 0
    %p103 = por %p101, %p102
    %p104 = scmp.ne.s32.totalorder %s92, %s93
    %p105 = scmp.eq.s32.totalorder %s20, 1
    %p106 = por %p104, %p105
    %p108 = scmp.ne.s32.totalorder %s93, %s107
    %p109 = scmp.eq.s32.totalorder %s20, 0
    %p110 = por %p108, %p109
    %s112 = sadd.s32 %s111, 1
    %p115 = scmp.eq.s32.totalorder %s14, 1
    %p116 = scmp.ne.s32.totalorder %s111, %s113
    %p117 = scmp.eq.s32.totalorder %s14, 0
    %p118 = por %p116, %p117
    %p119 = scmp.ne.s32.totalorder %s111, %s113
    %p120 = scmp.eq.s32.totalorder %s19, 1
    %p121 = por %p119, %p120
    %p122 = scmp.ne.s32.totalorder %s113, %s114
    %p123 = scmp.eq.s32.totalorder %s19, 0
    %p124 = por %p122, %p123
    %p125 = scmp.ne.s32.totalorder %s113, %s114
    %p126 = scmp.eq.s32.totalorder %s20, 1
    %p127 = por %p125, %p126
    %p129 = scmp.ne.s32.totalorder %s114, %s128
    %p130 = scmp.eq.s32.totalorder %s20, 0
    %p131 = por %p129, %p130
    %s133 = sadd.s32 %s132, 1
    %p136 = scmp.eq.s32.totalorder %s14, 1
    %p137 = scmp.ne.s32.totalorder %s132, %s134
    %p138 = scmp.eq.s32.totalorder %s14, 0
    %p139 = por %p137, %p138
    %p140 = scmp.ne.s32.totalorder %s132, %s134
    %p141 = scmp.eq.s32.totalorder %s19, 1
    %p142 = por %p140, %p141
    %p143 = scmp.ne.s32.totalorder %s134, %s135
    %p144 = scmp.eq.s32.totalorder %s19, 0
    %p145 = por %p143, %p144
    %p146 = scmp.ne.s32.totalorder %s134, %s135
    %p147 = scmp.eq.s32.totalorder %s20, 1
    %p148 = por %p146, %p147
    %p150 = scmp.ne.s32.totalorder %s135, %s149
    %p151 = scmp.eq.s32.totalorder %s20, 0
    %p152 = por %p150, %p151
    %s154 = sadd.s32 %s153, 1
    %p157 = scmp.eq.s32.totalorder %s14, 1
    %p158 = scmp.ne.s32.totalorder %s153, %s155
    %p159 = scmp.eq.s32.totalorder %s14, 0
    %p160 = por %p158, %p159
    %p161 = scmp.ne.s32.totalorder %s153, %s155
    %p162 = scmp.eq.s32.totalorder %s19, 1
    %p163 = por %p161, %p162
    %p164 = scmp.ne.s32.totalorder %s155, %s156
    %p165 = scmp.eq.s32.totalorder %s19, 0
    %p166 = por %p164, %p165
    %p167 = scmp.ne.s32.totalorder %s155, %s156
    %p168 = scmp.eq.s32.totalorder %s20, 1
    %p169 = por %p167, %p168
    %p171 = scmp.ne.s32.totalorder %s156, %s170
    %p172 = scmp.eq.s32.totalorder %s20, 0
    %p173 = por %p171, %p172
    %s175 = sadd.s32 %s174, 1
    %p178 = scmp.eq.s32.totalorder %s14, 1
    %p179 = scmp.ne.s32.totalorder %s174, %s176
    %p180 = scmp.eq.s32.totalorder %s14, 0
    %p181 = por %p179, %p180
    %p182 = scmp.ne.s32.totalorder %s174, %s176
    %p183 = scmp.eq.s32.totalorder %s19, 1
    %p184 = por %p182, %p183
    %p185 = scmp.ne.s32.totalorder %s176, %s177
    %p186 = scmp.eq.s32.totalorder %s19, 0
    %p187 = por %p185, %p186
    %p188 = scmp.ne.s32.totalorder %s176, %s177
    %p189 = scmp.eq.s32.totalorder %s20, 1
    %p190 = por %p188, %p189
    %p192 = scmp.ne.s32.totalorder %s177, %s191
    %p193 = scmp.eq.s32.totalorder %s20, 0
    %p194 = por %p192, %p193
    %s195 = ssub.s32 %s14, %s21
    %p196 = scmp.eq.s32.totalorder %s195, 0
    %s198 = sadd.s32 %s197, 1
    %s199 = scalar_select %p196, %s197, %s198
    %p202 = pneg %p196
    %p203 = scmp.eq.s32.totalorder %s14, 1
    %p204 = por %p202, %p203
    %p205 = scmp.ne.s32.totalorder %s197, %s200
    %p206 = scmp.eq.s32.totalorder %s14, 0
    %p207 = por %p205, %p206
    %p208 = scmp.ne.s32.totalorder %s197, %s200
    %p209 = scmp.eq.s32.totalorder %s19, 1
    %p210 = por %p208, %p209
    %p211 = scmp.ne.s32.totalorder %s200, %s201
    %p212 = scmp.eq.s32.totalorder %s19, 0
    %p213 = por %p211, %p212
    %p214 = scmp.ne.s32.totalorder %s200, %s201
    %p215 = scmp.eq.s32.totalorder %s20, 1
    %p216 = por %p214, %p215
    %p218 = scmp.ne.s32.totalorder %s201, %s217
    %p219 = scmp.eq.s32.totalorder %s20, 0
    %p220 = por %p218, %p219
    %p221 = scmp.le.s32.totalorder 1, %s14
    %p222 = scmp.lt.s32.totalorder %s14, 3
    %p223 = pnand %p221, %p222
    %p224 = pneg %p223
    // Predicated region
    $region9: #{bottleneck_block1.1} parent=5 // pred_check
      _
    $region10: #{bottleneck_block1.1} parent=5 // pred_check_branch
      %226 = sbr.rel (%p223) target = $region12
    $region11: #{bottleneck_block1.1} parent=5 // pred_region
      %s227 = ssub.s32 %s14, 1
      // Predicated region
      $region13: #{bottleneck_block1.1} parent=11 // pred_check
        %p228 = pneg %p61
      $region14: #{bottleneck_block1.1} parent=11 // pred_check_branch
        %230 = sbr.rel (%p228) target = $region16
      $region15: #{bottleneck_block1.1} parent=11 // pred_region
        _
      $region16: #{bottleneck_block1.1} parent=11 // pred_fallthru
        _
      // Predicated region
      $region17: #{bottleneck_block1.1} parent=11 // pred_check
        %p231 = pneg %p82
      $region18: #{bottleneck_block1.1} parent=11 // pred_check_branch
        %233 = sbr.rel (%p231) target = $region20
      $region19: #{bottleneck_block1.1} parent=11 // pred_region
        _
      $region20: #{bottleneck_block1.1} parent=11 // pred_fallthru
        _
      // Predicated region
      $region21: #{bottleneck_block1.1} parent=11 // pred_check
        %p234 = pneg %p103
      $region22: #{bottleneck_block1.1} parent=11 // pred_check_branch
        %236 = sbr.rel (%p234) target = $region24
      $region23: #{bottleneck_block1.1} parent=11 // pred_region
        _
      $region24: #{bottleneck_block1.1} parent=11 // pred_fallthru
        _
      // Predicated region
      $region25: #{bottleneck_block1.1} parent=11 // pred_check
        %p237 = pneg %p124
      $region26: #{bottleneck_block1.1} parent=11 // pred_check_branch
        %239 = sbr.rel (%p237) target = $region28
      $region27: #{bottleneck_block1.1} parent=11 // pred_region
        _
      $region28: #{bottleneck_block1.1} parent=11 // pred_fallthru
        _
      // Predicated region
      $region29: #{bottleneck_block1.1} parent=11 // pred_check
        %p240 = pneg %p145
      $region30: #{bottleneck_block1.1} parent=11 // pred_check_branch
        %242 = sbr.rel (%p240) target = $region32
      $region31: #{bottleneck_block1.1} parent=11 // pred_region
        _
      $region32: #{bottleneck_block1.1} parent=11 // pred_fallthru
        _
      // Predicated region
      $region33: #{bottleneck_block1.1} parent=11 // pred_check
        %p243 = pneg %p166
      $region34: #{bottleneck_block1.1} parent=11 // pred_check_branch
        %245 = sbr.rel (%p243) target = $region36
      $region35: #{bottleneck_block1.1} parent=11 // pred_region
        _
      $region36: #{bottleneck_block1.1} parent=11 // pred_fallthru
        _
      // Predicated region
      $region37: #{bottleneck_block1.1} parent=11 // pred_check
        %p246 = pneg %p187
      $region38: #{bottleneck_block1.1} parent=11 // pred_check_branch
        %248 = sbr.rel (%p246) target = $region40
      $region39: #{bottleneck_block1.1} parent=11 // pred_region
        _
      $region40: #{bottleneck_block1.1} parent=11 // pred_fallthru
        _
    $region12: #{bottleneck_block1.1} parent=5 // pred_fallthru
      _
    %p249 = scmp.lt.s32.totalorder %s14, 2
    // Predicated region
    $region41: #{bottleneck_block1.1} parent=5 // pred_check
      %p250 = pneg %p249
    $region42: #{bottleneck_block1.1} parent=5 // pred_check_branch
      %252 = sbr.rel (%p250) target = $region44
    $region43: #{bottleneck_block1.1} parent=5 // pred_region
      // Predicated region
      $region45: #{bottleneck_block1.1} parent=43 // pred_check
        %p253 = pneg %p34
      $region46: #{bottleneck_block1.1} parent=43 // pred_check_branch
        %255 = sbr.rel (%p253) target = $region48
      $region47: #{bottleneck_block1.1} parent=43 // pred_region
        %p256 = scmp.lt.s32.totalorder %s14, 1
        %s257 = scalar_select %p256, %s14, 1
        %s258 = smul.addr %s257, 2
        %s259 = smul.addr %s258, 4
        %s260 = scalar_lea.vmem %s0, %s259
      $region48: #{bottleneck_block1.1} parent=43 // pred_fallthru
        _
    $region44: #{bottleneck_block1.1} parent=5 // pred_fallthru
      _
    %p261 = scmp.le.s32.totalorder 1, %s14
    %p262 = scmp.lt.s32.totalorder %s14, 3
    %p263 = pnand %p261, %p262
    %p264 = pneg %p263
    // Predicated region
    $region49: #{bottleneck_block1.1} parent=5 // pred_check
      _
    $region50: #{bottleneck_block1.1} parent=5 // pred_check_branch
      %266 = sbr.rel (%p263) target = $region52
    $region51: #{bottleneck_block1.1} parent=5 // pred_region
      %s267 = ssub.s32 %s14, 1
      %p268 = scmp.lt.s32.totalorder %s19, 1
      %s269 = scalar_select %p268, %s19, 1
      %s270 = smul.addr %s269, 2
      %s271 = smul.addr %s270, 4
      %s272 = scalar_lea.vmem %s0, %s271
      %p273 = pneg %p40
      %p274 = pneg %p37
      %p275 = pneg %p61
      %p276 = pneg %p58
      %p277 = pneg %p82
      %p278 = pneg %p79
      %p279 = pneg %p103
      %p280 = pneg %p100
      %p281 = pneg %p124
      %p282 = pneg %p121
      %p283 = pneg %p145
      %p284 = pneg %p142
      %p285 = pneg %p166
      %p286 = pneg %p163
      %p287 = pneg %p187
      %p288 = pneg %p184
      %p289 = pneg %p213
      %p290 = pneg %p210
      %p291 = scmp.lt.s32.totalorder %s19, 1
      %s292 = scalar_select %p291, %s19, 1
      %s293 = smul.addr %s292, 2
      %s294 = smul.addr %s293, 8
      %s295 = scalar_lea.vmem %s8, %s294
      %p296 = scmp.lt.s32.totalorder %s19, 1
      %s297 = scalar_select %p296, %s19, 1
      %s298 = smul.addr %s297, 2
      %s299 = smul.addr %s298, 4
      %s300 = scalar_lea.vmem %s0, %s299
      %p301 = scmp.lt.s32.totalorder %s19, 1
      %s302 = scalar_select %p301, %s19, 1
      %s303 = smul.addr %s302, 2
      %s304 = smul.addr %s303, 8
      %s305 = scalar_lea.vmem %s8, %s304
      %v307 = vld [vmem:[%s300] sm:$0xff]
      %v309 = vcombine.high %v307, %v307
      %311 = vst [vmem:[%s305] sm:$0xf] %v307
      %312 = vst [vmem:[%s305 + $0x8] sm:$0xf] %v309
      %v313 = vld [vmem:[%s3] sm:$0xf]
      %315 = vset.pattern.permute.xlu0 0
      %316 = vperm.xlu0 %315, %v313
      %v317 = vpop.permute.xlu0 %316
      %v319 = vunpack.c.l.s4 839922192
      %v320 = vunpack.c.0.s8 %v319
      %v321 = vlaneseq
      %v322 = vshrl.u32 %v321, 7
      %v323 = vsub.s32 %v320, %v322
      %v324 = vrot.slane %v317, %v323
      %v326 = vmul.f32 %v307, %v324
      %v327 = vld [vmem:[%s4] sm:$0xf]
      %329 = vset.pattern.permute.xlu0 0
      %330 = vperm.xlu0 %329, %v327
      %v331 = vpop.permute.xlu0 %330
      %v333 = vunpack.c.l.s4 839922192
      %v334 = vunpack.c.0.s8 %v333
      %v335 = vlaneseq
      %v336 = vshrl.u32 %v335, 7
      %v337 = vsub.s32 %v334, %v336
      %v338 = vrot.slane %v331, %v337
      %v340 = vadd.f32 %v326, %v338
      %v341 = vmax.f32 %v340, 0.0
      %v342 = vld [vmem:[%s1] sm:$0xf]
      %v343 = vld [vmem:[%s1 + $0x4] sm:$0xf]
      %v345 = vcombine.high %v341, %v341
      %v347 = vpack.c.bf16 %v341, %v341
      %v348 = vpack.c.bf16 %v345, %v345
      %v351 = vunpack.c.l.b16 %v342
      %v352 = vunpack.c.l.b16 %v343
      %v353 = vpack.c.b16 %v352, %v351
      %vm354 = vcmask 31744
      %v356 = vsel %vm354, %v353, 0
      %vm358 = vcmask 1041408
      %v360 = vsel %vm358, %v347, 0
      %v363 = vsel %vm358, %v348, 0
      %365 = vmatprep.subr.bf16.mxu0 %v363
      %366 = vmatpush1.bf16.msra.mxu0 %v360
      %367 = vmatprep.subr.bf16.mxu0 0
      %368 = vmatpush1.bf16.msra.mxu0 0
      %369 = vmatprep.subr.bf16.mxu0 0
      %370 = vmatpush1.bf16.msra.mxu0 0
      %371 = vmatprep.subr.bf16.mxu0 0
      %372 = vmatpush1.bf16.msra.mxu0 0
      %373 = vmatprep.subr.bf16.mxu0 0
      %374 = vmatpush1.bf16.msra.mxu0 0
      %375 = vmatprep.subr.bf16.mxu0 0
      %376 = vmatpush1.bf16.msra.mxu0 0
      %377 = vmatprep.subr.bf16.mxu0 0
      %378 = vmatpush1.bf16.msra.mxu0 0
      %379 = vmatprep.subr.bf16.mxu0 0
      %380 = vmatpush1.bf16.msra.mxu0 0
      %381 = vmatprep.subr.bf16.mxu0 0
      %382 = vmatpush1.bf16.msra.mxu0 0
      %383 = vmatprep.subr.bf16.mxu0 0
      %384 = vmatpush1.bf16.msra.mxu0 0
      %385 = vmatprep.subr.bf16.mxu0 0
      %386 = vmatpush1.bf16.msra.mxu0 0
      %387 = vmatprep.subr.bf16.mxu0 0
      %388 = vmatpush1.bf16.msra.mxu0 0
      %389 = vmatprep.subr.bf16.mxu0 0
      %390 = vmatpush1.bf16.msra.mxu0 0
      %391 = vmatprep.subr.bf16.mxu0 0
      %392 = vmatpush1.bf16.msra.mxu0 0
      %393 = vmatprep.subr.bf16.mxu0 0
      %394 = vmatpush1.bf16.msra.mxu0 0
      %395 = vmatprep.subr.bf16.mxu0 0
      %396 = vmatpush1.bf16.msra.mxu0 0
      %397 = vmatprep.mubr.bf16.mxu0 0
      %398 = vmatmul.mubr.bf16.gmra.mrb[0].mxu0 %v356
      %v399 = vpop.f32.mrb[0].mxu0
      %v400 = vadd.f32 0.0, %v399
      %v401 = vpop.f32.mrb[0].mxu0
      %v402 = vadd.f32 0.0, %v401
      %v403 = vpop.f32.mrb[0].mxu0
      %v404 = vadd.f32 0.0, %v403
      %v405 = vpop.f32.mrb[0].mxu0
      %v406 = vadd.f32 0.0, %v405
      %407 = vdwg.mxu0
      %v408 = vld [vmem:[%s5] sm:$0xff]
      %v409 = vld [vmem:[%s5 + $0x8] sm:$0xff]
      %411 = vset.pattern.permute.xlu0 0
      %412 = vperm.xlu0 %411, %v408
      %v413 = vpop.permute.xlu0 %412
      %416 = vset.pattern.permute.xlu0 0
      %417 = vperm.xlu0 %416, %v409
      %v418 = vpop.permute.xlu0 %417
      %v420 = vmul.f32 %v400, %v413
      %v421 = vmul.f32 %v402, %v413
      %v422 = vmul.f32 %v404, %v418
      %v423 = vmul.f32 %v406, %v418
      %v424 = vld [vmem:[%s6] sm:$0xff]
      %v425 = vld [vmem:[%s6 + $0x8] sm:$0xff]
      %427 = vset.pattern.permute.xlu0 0
      %428 = vperm.xlu0 %427, %v424
      %v429 = vpop.permute.xlu0 %428
      %432 = vset.pattern.permute.xlu0 0
      %433 = vperm.xlu0 %432, %v425
      %v434 = vpop.permute.xlu0 %433
      %v436 = vadd.f32 %v420, %v429
      %v437 = vadd.f32 %v421, %v429
      %v438 = vadd.f32 %v422, %v434
      %v439 = vadd.f32 %v423, %v434
      %v440 = vmax.f32 %v436, 0.0
      %v441 = vmax.f32 %v437, 0.0
      %v442 = vmax.f32 %v438, 0.0
      %v443 = vmax.f32 %v439, 0.0
      %444 = vst [vmem:[#allocation2] sm:$0xff] 0.0
      %445 = vst [vmem:[#allocation2 + $0x8] sm:$0xff] 0.0
      %446 = vst [vmem:[#allocation2 + $0x10] sm:$0xff] 0.0
      %vm447 = vcmask 277504
      %448 = vst.msk [vmem:[#allocation2 + $0x18] sm:$0xff] %vm447, 0.0
      %449 = vst [vmem:[#allocation2 + $0x20] sm:$0xff] 0.0
      %450 = vst [vmem:[#allocation2 + $0x28] sm:$0xff] 0.0
      %451 = vst [vmem:[#allocation2 + $0x30] sm:$0xff] 0.0
      %452 = vst.msk [vmem:[#allocation2 + $0x38] sm:$0xff] %vm447, 0.0
      %453 = vst [vmem:[#allocation2 + $0x8] sm:$0xff] %v440
      %454 = vst [vmem:[#allocation2 + $0x10] sm:$0xff] %v441
      %455 = vst [vmem:[#allocation2 + $0x28] sm:$0xff] %v442
      %456 = vst [vmem:[#allocation2 + $0x30] sm:$0xff] %v443
      %v457 = vld [vmem:[%s7] ss:$8 sm:$0x3]
      %s458 = scalar_lea.vmem %s7, 1
      %v459 = vld [vmem:[%s458] ss:$8 sm:$0x3]
      %s460 = scalar_lea.vmem %s7, 3
      %v461 = vld [vmem:[%s460] ss:$8 sm:$0x3]
      %s462 = scalar_lea.vmem %s7, 4
      %v463 = vld [vmem:[%s462] ss:$8 sm:$0x3]
      %v464 = vld [vmem:[#allocation2] sm:$0xff]
      %v465 = vld [vmem:[#allocation2 + $0x8] sm:$0xff]
      %v466 = vld [vmem:[#allocation2 + $0x10] sm:$0xff]
      %v467 = vld [vmem:[#allocation2 + $0x20] sm:$0xff]
      %v468 = vld [vmem:[#allocation2 + $0x28] sm:$0xff]
      %v469 = vld [vmem:[#allocation2 + $0x30] sm:$0xff]
      %v471 = vlaneseq
      %v472 = vshrl.u32 %v471, 7
      %v473 = vsub.s32 0, %v472
      %v474 = vrot.slane %v457, %v473
      %v475 = vlaneseq
      %v476 = vshrl.u32 %v475, 7
      %v477 = vsub.s32 1, %v476
      %v478 = vrot.slane %v457, %v477
      %479 = vrot.lane.b32.xlu0 %v474, 94
      %v480 = vpop.permute.xlu0 %479
      %481 = vrot.lane.b32.xlu0 %v478, 94
      %v482 = vpop.permute.xlu0 %481
      %vm483 = vcmask 769024
      %v484 = vsel %vm483, %v480, %v482
      %v488 = vmul.f32 %v464, %v480
      %v489 = vmul.f32 %v465, %v484
      %v490 = vmul.f32 %v466, %v482
      %v491 = vmul.f32 %v467, %v480
      %v492 = vmul.f32 %v468, %v484
      %v493 = vmul.f32 %v469, %v482
      %v494 = vpack.c.bf16 %v491, %v488
      %v495 = vpack.c.bf16 %v492, %v489
      %v496 = vpack.c.bf16 %v493, %v490
      %500 = vrot.lane.b32.xlu0 %v494, 34
      %v501 = vpop.permute.xlu0 %500
      %502 = vrot.lane.b32.xlu0 %v495, 34
      %v503 = vpop.permute.xlu0 %502
      %504 = vrot.lane.b32.xlu0 %v496, 34
      %v505 = vpop.permute.xlu0 %504
      %vm506 = vcmask 277504
      %v507 = vsel %vm506, %v501, %v503
      %v508 = vsel %vm506, %v503, %v505
      %511 = vst [vmem:[#allocation3] sm:$0xff] %v507
      %512 = vst [vmem:[#allocation3 + $0x8] sm:$0xff] %v508
      %v513 = vld [vmem:[#allocation2] sm:$0xff]
      %v514 = vld [vmem:[#allocation2 + $0x8] sm:$0xff]
      %v515 = vld [vmem:[#allocation2 + $0x10] sm:$0xff]
      %v516 = vld [vmem:[#allocation2 + $0x20] sm:$0xff]
      %v517 = vld [vmem:[#allocation2 + $0x28] sm:$0xff]
      %v518 = vld [vmem:[#allocation2 + $0x30] sm:$0xff]
      %v520 = vlaneseq
      %v521 = vshrl.u32 %v520, 7
      %v522 = vsub.s32 0, %v521
      %v523 = vrot.slane %v459, %v522
      %v524 = vlaneseq
      %v525 = vshrl.u32 %v524, 7
      %v526 = vsub.s32 1, %v525
      %v527 = vrot.slane %v459, %v526
      %528 = vrot.lane.b32.xlu0 %v523, 95
      %v529 = vpop.permute.xlu0 %528
      %530 = vrot.lane.b32.xlu0 %v527, 95
      %v531 = vpop.permute.xlu0 %530
      %vm532 = vcmask 777216
      %v533 = vsel %vm532, %v529, %v531
      %v537 = vmul.f32 %v513, %v529
      %v538 = vmul.f32 %v514, %v533
      %v539 = vmul.f32 %v515, %v531
      %v540 = vmul.f32 %v516, %v529
      %v541 = vmul.f32 %v517, %v533
      %v542 = vmul.f32 %v518, %v531
      %v543 = vpack.c.bf16 %v540, %v537
      %v544 = vpack.c.bf16 %v541, %v538
      %v545 = vpack.c.bf16 %v542, %v539
      %549 = vrot.lane.b32.xlu0 %v543, 33
      %v550 = vpop.permute.xlu0 %549
      %551 = vrot.lane.b32.xlu0 %v544, 33
      %v552 = vpop.permute.xlu0 %551
      %553 = vrot.lane.b32.xlu0 %v545, 33
      %v554 = vpop.permute.xlu0 %553
      %vm555 = vcmask 269312
      %v556 = vsel %vm555, %v550, %v552
      %v557 = vsel %vm555, %v552, %v554
      %560 = vst [vmem:[#allocation3 + $0x10] sm:$0xff] %v556
      %561 = vst [vmem:[#allocation3 + $0x18] sm:$0xff] %v557
      %v562 = vld [vmem:[#allocation2] sm:$0xff]
      %v563 = vld [vmem:[#allocation2 + $0x8] sm:$0xff]
      %v564 = vld [vmem:[#allocation2 + $0x10] sm:$0xff]
      %v565 = vld [vmem:[#allocation2 + $0x20] sm:$0xff]
      %v566 = vld [vmem:[#allocation2 + $0x28] sm:$0xff]
      %v567 = vld [vmem:[#allocation2 + $0x30] sm:$0xff]
      %v568 = vpack.c.bf16 %v565, %v562
      %v569 = vpack.c.bf16 %v566, %v563
      %v570 = vpack.c.bf16 %v567, %v564
      %574 = vrot.lane.b32.xlu0 %v568, 32
      %v575 = vpop.permute.xlu0 %574
      %576 = vrot.lane.b32.xlu0 %v569, 32
      %v577 = vpop.permute.xlu0 %576
      %578 = vrot.lane.b32.xlu0 %v570, 32
      %v579 = vpop.permute.xlu0 %578
      %vm580 = vcmask 261120
      %v581 = vsel %vm580, %v575, %v577
      %v582 = vsel %vm580, %v577, %v579
      %585 = vst [vmem:[#allocation3 + $0x20] sm:$0xff] %v581
      %586 = vst [vmem:[#allocation3 + $0x28] sm:$0xff] %v582
      %v587 = vld [vmem:[#allocation2] sm:$0xff]
      %v588 = vld [vmem:[#allocation2 + $0x8] sm:$0xff]
      %v589 = vld [vmem:[#allocation2 + $0x10] sm:$0xff]
      %v590 = vld [vmem:[#allocation2 + $0x20] sm:$0xff]
      %v591 = vld [vmem:[#allocation2 + $0x28] sm:$0xff]
      %v592 = vld [vmem:[#allocation2 + $0x30] sm:$0xff]
      %v594 = vlaneseq
      %v595 = vshrl.u32 %v594, 7
      %v596 = vsub.s32 0, %v595
      %v597 = vrot.slane %v461, %v596
      %v598 = vlaneseq
      %v599 = vshrl.u32 %v598, 7
      %v600 = vsub.s32 1, %v599
      %v601 = vrot.slane %v461, %v600
      %602 = vrot.lane.b32.xlu0 %v597, 97
      %v603 = vpop.permute.xlu0 %602
      %604 = vrot.lane.b32.xlu0 %v601, 97
      %v605 = vpop.permute.xlu0 %604
      %vm606 = vcmask 793600
      %v607 = vsel %vm606, %v603, %v605
      %v611 = vmul.f32 %v587, %v603
      %v612 = vmul.f32 %v588, %v607
      %v613 = vmul.f32 %v589, %v605
      %v614 = vmul.f32 %v590, %v603
      %v615 = vmul.f32 %v591, %v607
      %v616 = vmul.f32 %v592, %v605
      %v617 = vpack.c.bf16 %v614, %v611
      %v618 = vpack.c.bf16 %v615, %v612
      %v619 = vpack.c.bf16 %v616, %v613
      %623 = vrot.lane.b32.xlu0 %v617, 31
      %v624 = vpop.permute.xlu0 %623
      %625 = vrot.lane.b32.xlu0 %v618, 31
      %v626 = vpop.permute.xlu0 %625
      %627 = vrot.lane.b32.xlu0 %v619, 31
      %v628 = vpop.permute.xlu0 %627
      %vm629 = vcmask 252928
      %v630 = vsel %vm629, %v624, %v626
      %v631 = vsel %vm629, %v626, %v628
      %634 = vst [vmem:[#allocation3 + $0x30] sm:$0xff] %v630
      %635 = vst [vmem:[#allocation3 + $0x38] sm:$0xff] %v631
      %v636 = vld [vmem:[#allocation2] sm:$0xff]
      %v637 = vld [vmem:[#allocation2 + $0x8] sm:$0xff]
      %v638 = vld [vmem:[#allocation2 + $0x10] sm:$0xff]
      %v639 = vld [vmem:[#allocation2 + $0x20] sm:$0xff]
      %v640 = vld [vmem:[#allocation2 + $0x28] sm:$0xff]
      %v641 = vld [vmem:[#allocation2 + $0x30] sm:$0xff]
      %v643 = vlaneseq
      %v644 = vshrl.u32 %v643, 7
      %v645 = vsub.s32 0, %v644
      %v646 = vrot.slane %v463, %v645
      %v647 = vlaneseq
      %v648 = vshrl.u32 %v647, 7
      %v649 = vsub.s32 1, %v648
      %v650 = vrot.slane %v463, %v649
      %651 = vrot.lane.b32.xlu0 %v646, 98
      %v652 = vpop.permute.xlu0 %651
      %653 = vrot.lane.b32.xlu0 %v650, 98
      %v654 = vpop.permute.xlu0 %653
      %vm655 = vcmask 801792
      %v656 = vsel %vm655, %v652, %v654
      %v660 = vmul.f32 %v636, %v652
      %v661 = vmul.f32 %v637, %v656
      %v662 = vmul.f32 %v638, %v654
      %v663 = vmul.f32 %v639, %v652
      %v664 = vmul.f32 %v640, %v656
      %v665 = vmul.f32 %v641, %v654
      %v666 = vpack.c.bf16 %v663, %v660
      %v667 = vpack.c.bf16 %v664, %v661
      %v668 = vpack.c.bf16 %v665, %v662
      %672 = vrot.lane.b32.xlu0 %v666, 30
      %v673 = vpop.permute.xlu0 %672
      %674 = vrot.lane.b32.xlu0 %v667, 30
      %v675 = vpop.permute.xlu0 %674
      %676 = vrot.lane.b32.xlu0 %v668, 30
      %v677 = vpop.permute.xlu0 %676
      %vm678 = vcmask 244736
      %v679 = vsel %vm678, %v673, %v675
      %v680 = vsel %vm678, %v675, %v677
      %683 = vst [vmem:[#allocation3 + $0x40] sm:$0xff] %v679
      %684 = vst [vmem:[#allocation3 + $0x48] sm:$0xff] %v680
      %v685 = vld [vmem:[#allocation2] sm:$0xff]
      %v686 = vld [vmem:[#allocation2 + $0x8] sm:$0xff]
      %v687 = vld [vmem:[#allocation2 + $0x10] sm:$0xff]
      %v688 = vld [vmem:[#allocation2 + $0x20] sm:$0xff]
      %v689 = vld [vmem:[#allocation2 + $0x28] sm:$0xff]
      %v690 = vld [vmem:[#allocation2 + $0x30] sm:$0xff]
      %691 = vrot.lane.b32.xlu0 %v474, 110
      %v692 = vpop.permute.xlu0 %691
      %693 = vrot.lane.b32.xlu0 %v478, 110
      %v694 = vpop.permute.xlu0 %693
      %vm695 = vcmask 900096
      %v696 = vsel %vm695, %v692, %v694
      %v700 = vmul.f32 %v685, %v692
      %v701 = vmul.f32 %v686, %v696
      %v702 = vmul.f32 %v687, %v694
      %v703 = vmul.f32 %v688, %v692
      %v704 = vmul.f32 %v689, %v696
      %v705 = vmul.f32 %v690, %v694
      %v706 = vpack.c.bf16 %v703, %v700
      %v707 = vpack.c.bf16 %v704, %v701
      %v708 = vpack.c.bf16 %v705, %v702
      %712 = vrot.lane.b32.xlu0 %v706, 18
      %v713 = vpop.permute.xlu0 %712
      %714 = vrot.lane.b32.xlu0 %v707, 18
      %v715 = vpop.permute.xlu0 %714
      %716 = vrot.lane.b32.xlu0 %v708, 18
      %v717 = vpop.permute.xlu0 %716
      %vm718 = vcmask 146432
      %v719 = vsel %vm718, %v713, %v715
      %v720 = vsel %vm718, %v715, %v717
      %723 = vst [vmem:[#allocation3 + $0x50] sm:$0xff] %v719
      %724 = vst [vmem:[#allocation3 + $0x58] sm:$0xff] %v720
      %v725 = vld [vmem:[#allocation2] sm:$0xff]
      %v726 = vld [vmem:[#allocation2 + $0x8] sm:$0xff]
      %v727 = vld [vmem:[#allocation2 + $0x10] sm:$0xff]
      %v728 = vld [vmem:[#allocation2 + $0x20] sm:$0xff]
      %v729 = vld [vmem:[#allocation2 + $0x28] sm:$0xff]
      %v730 = vld [vmem:[#allocation2 + $0x30] sm:$0xff]
      %731 = vrot.lane.b32.xlu0 %v523, 111
      %v732 = vpop.permute.xlu0 %731
      %733 = vrot.lane.b32.xlu0 %v527, 111
      %v734 = vpop.permute.xlu0 %733
      %vm735 = vcmask 908288
      %v736 = vsel %vm735, %v732, %v734
      %v740 = vmul.f32 %v725, %v732
      %v741 = vmul.f32 %v726, %v736
      %v742 = vmul.f32 %v727, %v734
      %v743 = vmul.f32 %v728, %v732
      %v744 = vmul.f32 %v729, %v736
      %v745 = vmul.f32 %v730, %v734
      %v746 = vpack.c.bf16 %v743, %v740
      %v747 = vpack.c.bf16 %v744, %v741
      %v748 = vpack.c.bf16 %v745, %v742
      %752 = vrot.lane.b32.xlu0 %v746, 17
      %v753 = vpop.permute.xlu0 %752
      %754 = vrot.lane.b32.xlu0 %v747, 17
      %v755 = vpop.permute.xlu0 %754
      %756 = vrot.lane.b32.xlu0 %v748, 17
      %v757 = vpop.permute.xlu0 %756
      %vm758 = vcmask 138240
      %v759 = vsel %vm758, %v753, %v755
      %v760 = vsel %vm758, %v755, %v757
      %763 = vst [vmem:[#allocation3 + $0x60] sm:$0xff] %v759
      %764 = vst [vmem:[#allocation3 + $0x68] sm:$0xff] %v760
      %v765 = vld [vmem:[#allocation2] sm:$0xff]
      %v766 = vld [vmem:[#allocation2 + $0x8] sm:$0xff]
      %v767 = vld [vmem:[#allocation2 + $0x10] sm:$0xff]
      %v768 = vld [vmem:[#allocation2 + $0x20] sm:$0xff]
      %v769 = vld [vmem:[#allocation2 + $0x28] sm:$0xff]
      %v770 = vld [vmem:[#allocation2 + $0x30] sm:$0xff]
      %v771 = vpack.c.bf16 %v768, %v765
      %v772 = vpack.c.bf16 %v769, %v766
      %v773 = vpack.c.bf16 %v770, %v767
      %777 = vrot.lane.b32.xlu0 %v771, 16
      %v778 = vpop.permute.xlu0 %777
      %779 = vrot.lane.b32.xlu0 %v772, 16
      %v780 = vpop.permute.xlu0 %779
      %781 = vrot.lane.b32.xlu0 %v773, 16
      %v782 = vpop.permute.xlu0 %781
      %vm783 = vcmask 130048
      %v784 = vsel %vm783, %v778, %v780
      %v785 = vsel %vm783, %v780, %v782
      %788 = vst [vmem:[#allocation3 + $0x70] sm:$0xff] %v784
      %789 = vst [vmem:[#allocation3 + $0x78] sm:$0xff] %v785
      %v790 = vld [vmem:[#allocation2] sm:$0xff]
      %v791 = vld [vmem:[#allocation2 + $0x8] sm:$0xff]
      %v792 = vld [vmem:[#allocation2 + $0x10] sm:$0xff]
      %v793 = vld [vmem:[#allocation2 + $0x20] sm:$0xff]
      %v794 = vld [vmem:[#allocation2 + $0x28] sm:$0xff]
      %v795 = vld [vmem:[#allocation2 + $0x30] sm:$0xff]
      %796 = vrot.lane.b32.xlu0 %v597, 113
      %v797 = vpop.permute.xlu0 %796
      %798 = vrot.lane.b32.xlu0 %v601, 113
      %v799 = vpop.permute.xlu0 %798
      %vm800 = vcmask 924672
      %v801 = vsel %vm800, %v797, %v799
      %v805 = vmul.f32 %v790, %v797
      %v806 = vmul.f32 %v791, %v801
      %v807 = vmul.f32 %v792, %v799
      %v808 = vmul.f32 %v793, %v797
      %v809 = vmul.f32 %v794, %v801
      %v810 = vmul.f32 %v795, %v799
      %v811 = vpack.c.bf16 %v808, %v805
      %v812 = vpack.c.bf16 %v809, %v806
      %v813 = vpack.c.bf16 %v810, %v807
      %817 = vrot.lane.b32.xlu0 %v811, 15
      %v818 = vpop.permute.xlu0 %817
      %819 = vrot.lane.b32.xlu0 %v812, 15
      %v820 = vpop.permute.xlu0 %819
      %821 = vrot.lane.b32.xlu0 %v813, 15
      %v822 = vpop.permute.xlu0 %821
      %vm823 = vcmask 121856
      %v824 = vsel %vm823, %v818, %v820
      %v825 = vsel %vm823, %v820, %v822
      %828 = vst [vmem:[#allocation3 + $0x80] sm:$0xff] %v824
      %829 = vst [vmem:[#allocation3 + $0x88] sm:$0xff] %v825
      %v830 = vld [vmem:[#allocation2] sm:$0xff]
      %v831 = vld [vmem:[#allocation2 + $0x8] sm:$0xff]
      %v832 = vld [vmem:[#allocation2 + $0x10] sm:$0xff]
      %v833 = vld [vmem:[#allocation2 + $0x20] sm:$0xff]
      %v834 = vld [vmem:[#allocation2 + $0x28] sm:$0xff]
      %v835 = vld [vmem:[#allocation2 + $0x30] sm:$0xff]
      %836 = vrot.lane.b32.xlu0 %v646, 114
      %v837 = vpop.permute.xlu0 %836
      %838 = vrot.lane.b32.xlu0 %v650, 114
      %v839 = vpop.permute.xlu0 %838
      %vm840 = vcmask 932864
      %v841 = vsel %vm840, %v837, %v839
      %v845 = vmul.f32 %v830, %v837
      %v846 = vmul.f32 %v831, %v841
      %v847 = vmul.f32 %v832, %v839
      %v848 = vmul.f32 %v833, %v837
      %v849 = vmul.f32 %v834, %v841
      %v850 = vmul.f32 %v835, %v839
      %v851 = vpack.c.bf16 %v848, %v845
      %v852 = vpack.c.bf16 %v849, %v846
      %v853 = vpack.c.bf16 %v850, %v847
      %857 = vrot.lane.b32.xlu0 %v851, 14
      %v858 = vpop.permute.xlu0 %857
      %859 = vrot.lane.b32.xlu0 %v852, 14
      %v860 = vpop.permute.xlu0 %859
      %861 = vrot.lane.b32.xlu0 %v853, 14
      %v862 = vpop.permute.xlu0 %861
      %vm863 = vcmask 113664
      %v864 = vsel %vm863, %v858, %v860
      %v865 = vsel %vm863, %v860, %v862
      %868 = vst [vmem:[#allocation3 + $0x90] sm:$0xff] %v864
      %869 = vst [vmem:[#allocation3 + $0x98] sm:$0xff] %v865
      %v870 = vld [vmem:[#allocation2] sm:$0xff]
      %v871 = vld [vmem:[#allocation2 + $0x8] sm:$0xff]
      %v872 = vld [vmem:[#allocation2 + $0x10] sm:$0xff]
      %v873 = vld [vmem:[#allocation2 + $0x20] sm:$0xff]
      %v874 = vld [vmem:[#allocation2 + $0x28] sm:$0xff]
      %v875 = vld [vmem:[#allocation2 + $0x30] sm:$0xff]
      %876 = vrot.lane.b32.xlu0 %v474, 126
      %v877 = vpop.permute.xlu0 %876
      %878 = vrot.lane.b32.xlu0 %v478, 126
      %v879 = vpop.permute.xlu0 %878
      %vm880 = vcmask 1031168
      %v881 = vsel %vm880, %v877, %v879
      %v885 = vmul.f32 %v870, %v877
      %v886 = vmul.f32 %v871, %v881
      %v887 = vmul.f32 %v872, %v879
      %v888 = vmul.f32 %v873, %v877
      %v889 = vmul.f32 %v874, %v881
      %v890 = vmul.f32 %v875, %v879
      %v891 = vpack.c.bf16 %v888, %v885
      %v892 = vpack.c.bf16 %v889, %v886
      %v893 = vpack.c.bf16 %v890, %v887
      %897 = vrot.lane.b32.xlu0 %v891, 2
      %v898 = vpop.permute.xlu0 %897
      %899 = vrot.lane.b32.xlu0 %v892, 2
      %v900 = vpop.permute.xlu0 %899
      %901 = vrot.lane.b32.xlu0 %v893, 2
      %v902 = vpop.permute.xlu0 %901
      %vm903 = vcmask 15360
      %v904 = vsel %vm903, %v898, %v900
      %v905 = vsel %vm903, %v900, %v902
      %908 = vst [vmem:[#allocation3 + $0xa0] sm:$0xff] %v904
      %909 = vst [vmem:[#allocation3 + $0xa8] sm:$0xff] %v905
      %v910 = vld [vmem:[#allocation2] sm:$0xff]
      %v911 = vld [vmem:[#allocation2 + $0x8] sm:$0xff]
      %v912 = vld [vmem:[#allocation2 + $0x10] sm:$0xff]
      %v913 = vld [vmem:[#allocation2 + $0x20] sm:$0xff]
      %v914 = vld [vmem:[#allocation2 + $0x28] sm:$0xff]
      %v915 = vld [vmem:[#allocation2 + $0x30] sm:$0xff]
      %916 = vrot.lane.b32.xlu0 %v523, 127
      %v917 = vpop.permute.xlu0 %916
      %918 = vrot.lane.b32.xlu0 %v527, 127
      %v919 = vpop.permute.xlu0 %918
      %vm920 = vcmask 1039360
      %v921 = vsel %vm920, %v917, %v919
      %v925 = vmul.f32 %v910, %v917
      %v926 = vmul.f32 %v911, %v921
      %v927 = vmul.f32 %v912, %v919
      %v928 = vmul.f32 %v913, %v917
      %v929 = vmul.f32 %v914, %v921
      %v930 = vmul.f32 %v915, %v919
      %v931 = vpack.c.bf16 %v928, %v925
      %v932 = vpack.c.bf16 %v929, %v926
      %v933 = vpack.c.bf16 %v930, %v927
      %937 = vrot.lane.b32.xlu0 %v931, 1
      %v938 = vpop.permute.xlu0 %937
      %939 = vrot.lane.b32.xlu0 %v932, 1
      %v940 = vpop.permute.xlu0 %939
      %941 = vrot.lane.b32.xlu0 %v933, 1
      %v942 = vpop.permute.xlu0 %941
      %vm943 = vcmask 7168
      %v944 = vsel %vm943, %v938, %v940
      %v945 = vsel %vm943, %v940, %v942
      %948 = vst [vmem:[#allocation3 + $0xb0] sm:$0xff] %v944
      %949 = vst [vmem:[#allocation3 + $0xb8] sm:$0xff] %v945
      %v950 = vld [vmem:[#allocation2 + $0x8] sm:$0xff]
      %v951 = vld [vmem:[#allocation2 + $0x10] sm:$0xff]
      %v952 = vld [vmem:[#allocation2 + $0x28] sm:$0xff]
      %v953 = vld [vmem:[#allocation2 + $0x30] sm:$0xff]
      %v954 = vpack.c.bf16 %v952, %v950
      %v955 = vpack.c.bf16 %v953, %v951
      %956 = vst [vmem:[#allocation3 + $0xc0] sm:$0xff] %v954
      %957 = vst [vmem:[#allocation3 + $0xc8] sm:$0xff] %v955
      %v958 = vld [vmem:[#allocation2 + $0x8] sm:$0xff]
      %v959 = vld [vmem:[#allocation2 + $0x10] sm:$0xff]
      %v960 = vld [vmem:[#allocation2 + $0x18] sm:$0xff]
      %v961 = vld [vmem:[#allocation2 + $0x28] sm:$0xff]
      %v962 = vld [vmem:[#allocation2 + $0x30] sm:$0xff]
      %v963 = vld [vmem:[#allocation2 + $0x38] sm:$0xff]
      %964 = vrot.lane.b32.xlu0 %v597, 1
      %v965 = vpop.permute.xlu0 %964
      %966 = vrot.lane.b32.xlu0 %v601, 1
      %v967 = vpop.permute.xlu0 %966
      %vm968 = vcmask 7168
      %v969 = vsel %vm968, %v965, %v967
      %v973 = vmul.f32 %v958, %v965
      %v974 = vmul.f32 %v959, %v969
      %v975 = vmul.f32 %v960, %v967
      %v976 = vmul.f32 %v961, %v965
      %v977 = vmul.f32 %v962, %v969
      %v978 = vmul.f32 %v963, %v967
      %v979 = vpack.c.bf16 %v976, %v973
      %v980 = vpack.c.bf16 %v977, %v974
      %v981 = vpack.c.bf16 %v978, %v975
      %985 = vrot.lane.b32.xlu0 %v979, 127
      %v986 = vpop.permute.xlu0 %985
      %987 = vrot.lane.b32.xlu0 %v980, 127
      %v988 = vpop.permute.xlu0 %987
      %989 = vrot.lane.b32.xlu0 %v981, 127
      %v990 = vpop.permute.xlu0 %989
      %vm991 = vcmask 1039360
      %v992 = vsel %vm991, %v986, %v988
      %v993 = vsel %vm991, %v988, %v990
      %996 = vst [vmem:[#allocation3 + $0xd0] sm:$0xff] %v992
      %997 = vst [vmem:[#allocation3 + $0xd8] sm:$0xff] %v993
      %v998 = vld [vmem:[#allocation2 + $0x8] sm:$0xff]
      %v999 = vld [vmem:[#allocation2 + $0x10] sm:$0xff]
      %v1000 = vld [vmem:[#allocation2 + $0x18] sm:$0xff]
      %v1001 = vld [vmem:[#allocation2 + $0x28] sm:$0xff]
      %v1002 = vld [vmem:[#allocation2 + $0x30] sm:$0xff]
      %v1003 = vld [vmem:[#allocation2 + $0x38] sm:$0xff]
      %1004 = vrot.lane.b32.xlu0 %v646, 2
      %v1005 = vpop.permute.xlu0 %1004
      %1006 = vrot.lane.b32.xlu0 %v650, 2
      %v1007 = vpop.permute.xlu0 %1006
      %vm1008 = vcmask 15360
      %v1009 = vsel %vm1008, %v1005, %v1007
      %v1013 = vmul.f32 %v998, %v1005
      %v1014 = vmul.f32 %v999, %v1009
      %v1015 = vmul.f32 %v1000, %v1007
      %v1016 = vmul.f32 %v1001, %v1005
      %v1017 = vmul.f32 %v1002, %v1009
      %v1018 = vmul.f32 %v1003, %v1007
      %v1019 = vpack.c.bf16 %v1016, %v1013
      %v1020 = vpack.c.bf16 %v1017, %v1014
      %v1021 = vpack.c.bf16 %v1018, %v1015
      %1025 = vrot.lane.b32.xlu0 %v1019, 126
      %v1026 = vpop.permute.xlu0 %1025
      %1027 = vrot.lane.b32.xlu0 %v1020, 126
      %v1028 = vpop.permute.xlu0 %1027
      %1029 = vrot.lane.b32.xlu0 %v1021, 126
      %v1030 = vpop.permute.xlu0 %1029
      %vm1031 = vcmask 1031168
      %v1032 = vsel %vm1031, %v1026, %v1028
      %v1033 = vsel %vm1031, %v1028, %v1030
      %1036 = vst [vmem:[#allocation3 + $0xe0] sm:$0xff] %v1032
      %1037 = vst [vmem:[#allocation3 + $0xe8] sm:$0xff] %v1033
      %v1038 = vld [vmem:[#allocation2 + $0x8] sm:$0xff]
      %v1039 = vld [vmem:[#allocation2 + $0x10] sm:$0xff]
      %v1040 = vld [vmem:[#allocation2 + $0x18] sm:$0xff]
      %v1041 = vld [vmem:[#allocation2 + $0x28] sm:$0xff]
      %v1042 = vld [vmem:[#allocation2 + $0x30] sm:$0xff]
      %v1043 = vld [vmem:[#allocation2 + $0x38] sm:$0xff]
      %1044 = vrot.lane.b32.xlu0 %v474, 14
      %v1045 = vpop.permute.xlu0 %1044
      %1046 = vrot.lane.b32.xlu0 %v478, 14
      %v1047 = vpop.permute.xlu0 %1046
      %vm1048 = vcmask 113664
      %v1049 = vsel %vm1048, %v1045, %v1047
      %v1053 = vmul.f32 %v1038, %v1045
      %v1054 = vmul.f32 %v1039, %v1049
      %v1055 = vmul.f32 %v1040, %v1047
      %v1056 = vmul.f32 %v1041, %v1045
      %v1057 = vmul.f32 %v1042, %v1049
      %v1058 = vmul.f32 %v1043, %v1047
      %v1059 = vpack.c.bf16 %v1056, %v1053
      %v1060 = vpack.c.bf16 %v1057, %v1054
      %v1061 = vpack.c.bf16 %v1058, %v1055
      %1065 = vrot.lane.b32.xlu0 %v1059, 114
      %v1066 = vpop.permute.xlu0 %1065
      %1067 = vrot.lane.b32.xlu0 %v1060, 114
      %v1068 = vpop.permute.xlu0 %1067
      %1069 = vrot.lane.b32.xlu0 %v1061, 114
      %v1070 = vpop.permute.xlu0 %1069
      %vm1071 = vcmask 932864
      %v1072 = vsel %vm1071, %v1066, %v1068
      %v1073 = vsel %vm1071, %v1068, %v1070
      %1076 = vst [vmem:[#allocation3 + $0xf0] sm:$0xff] %v1072
      %1077 = vst [vmem:[#allocation3 + $0xf8] sm:$0xff] %v1073
      %v1078 = vld [vmem:[#allocation2 + $0x8] sm:$0xff]
      %v1079 = vld [vmem:[#allocation2 + $0x10] sm:$0xff]
      %v1080 = vld [vmem:[#allocation2 + $0x18] sm:$0xff]
      %v1081 = vld [vmem:[#allocation2 + $0x28] sm:$0xff]
      %v1082 = vld [vmem:[#allocation2 + $0x30] sm:$0xff]
      %v1083 = vld [vmem:[#allocation2 + $0x38] sm:$0xff]
      %1084 = vrot.lane.b32.xlu0 %v523, 15
      %v1085 = vpop.permute.xlu0 %1084
      %1086 = vrot.lane.b32.xlu0 %v527, 15
      %v1087 = vpop.permute.xlu0 %1086
      %vm1088 = vcmask 121856
      %v1089 = vsel %vm1088, %v1085, %v1087
      %v1093 = vmul.f32 %v1078, %v1085
      %v1094 = vmul.f32 %v1079, %v1089
      %v1095 = vmul.f32 %v1080, %v1087
      %v1096 = vmul.f32 %v1081, %v1085
      %v1097 = vmul.f32 %v1082, %v1089
      %v1098 = vmul.f32 %v1083, %v1087
      %v1099 = vpack.c.bf16 %v1096, %v1093
      %v1100 = vpack.c.bf16 %v1097, %v1094
      %v1101 = vpack.c.bf16 %v1098, %v1095
      %1105 = vrot.lane.b32.xlu0 %v1099, 113
      %v1106 = vpop.permute.xlu0 %1105
      %1107 = vrot.lane.b32.xlu0 %v1100, 113
      %v1108 = vpop.permute.xlu0 %1107
      %1109 = vrot.lane.b32.xlu0 %v1101, 113
      %v1110 = vpop.permute.xlu0 %1109
      %vm1111 = vcmask 924672
      %v1112 = vsel %vm1111, %v1106, %v1108
      %v1113 = vsel %vm1111, %v1108, %v1110
      %1116 = vst [vmem:[#allocation3 + $0x100] sm:$0xff] %v1112
      %1117 = vst [vmem:[#allocation3 + $0x108] sm:$0xff] %v1113
      %v1118 = vld [vmem:[#allocation2 + $0x8] sm:$0xff]
      %v1119 = vld [vmem:[#allocation2 + $0x10] sm:$0xff]
      %v1120 = vld [vmem:[#allocation2 + $0x18] sm:$0xff]
      %v1121 = vld [vmem:[#allocation2 + $0x28] sm:$0xff]
      %v1122 = vld [vmem:[#allocation2 + $0x30] sm:$0xff]
      %v1123 = vld [vmem:[#allocation2 + $0x38] sm:$0xff]
      %v1124 = vpack.c.bf16 %v1121, %v1118
      %v1125 = vpack.c.bf16 %v1122, %v1119
      %v1126 = vpack.c.bf16 %v1123, %v1120
      %1130 = vrot.lane.b32.xlu0 %v1124, 112
      %v1131 = vpop.permute.xlu0 %1130
      %1132 = vrot.lane.b32.xlu0 %v1125, 112
      %v1133 = vpop.permute.xlu0 %1132
      %1134 = vrot.lane.b32.xlu0 %v1126, 112
      %v1135 = vpop.permute.xlu0 %1134
      %vm1136 = vcmask 916480
      %v1137 = vsel %vm1136, %v1131, %v1133
      %v1138 = vsel %vm1136, %v1133, %v1135
      %1141 = vst [vmem:[#allocation3 + $0x110] sm:$0xff] %v1137
      %1142 = vst [vmem:[#allocation3 + $0x118] sm:$0xff] %v1138
      %v1143 = vld [vmem:[#allocation2 + $0x8] sm:$0xff]
      %v1144 = vld [vmem:[#allocation2 + $0x10] sm:$0xff]
      %v1145 = vld [vmem:[#allocation2 + $0x18] sm:$0xff]
      %v1146 = vld [vmem:[#allocation2 + $0x28] sm:$0xff]
      %v1147 = vld [vmem:[#allocation2 + $0x30] sm:$0xff]
      %v1148 = vld [vmem:[#allocation2 + $0x38] sm:$0xff]
      %1149 = vrot.lane.b32.xlu0 %v597, 17
      %v1150 = vpop.permute.xlu0 %1149
      %1151 = vrot.lane.b32.xlu0 %v601, 17
      %v1152 = vpop.permute.xlu0 %1151
      %vm1153 = vcmask 138240
      %v1154 = vsel %vm1153, %v1150, %v1152
      %v1158 = vmul.f32 %v1143, %v1150
      %v1159 = vmul.f32 %v1144, %v1154
      %v1160 = vmul.f32 %v1145, %v1152
      %v1161 = vmul.f32 %v1146, %v1150
      %v1162 = vmul.f32 %v1147, %v1154
      %v1163 = vmul.f32 %v1148, %v1152
      %v1164 = vpack.c.bf16 %v1161, %v1158
      %v1165 = vpack.c.bf16 %v1162, %v1159
      %v1166 = vpack.c.bf16 %v1163, %v1160
      %1170 = vrot.lane.b32.xlu0 %v1164, 111
      %v1171 = vpop.permute.xlu0 %1170
      %1172 = vrot.lane.b32.xlu0 %v1165, 111
      %v1173 = vpop.permute.xlu0 %1172
      %1174 = vrot.lane.b32.xlu0 %v1166, 111
      %v1175 = vpop.permute.xlu0 %1174
      %vm1176 = vcmask 908288
      %v1177 = vsel %vm1176, %v1171, %v1173
      %v1178 = vsel %vm1176, %v1173, %v1175
      %1181 = vst [vmem:[#allocation3 + $0x120] sm:$0xff] %v1177
      %1182 = vst [vmem:[#allocation3 + $0x128] sm:$0xff] %v1178
      %v1183 = vld [vmem:[#allocation2 + $0x8] sm:$0xff]
      %v1184 = vld [vmem:[#allocation2 + $0x10] sm:$0xff]
      %v1185 = vld [vmem:[#allocation2 + $0x18] sm:$0xff]
      %v1186 = vld [vmem:[#allocation2 + $0x28] sm:$0xff]
      %v1187 = vld [vmem:[#allocation2 + $0x30] sm:$0xff]
      %v1188 = vld [vmem:[#allocation2 + $0x38] sm:$0xff]
      %1189 = vrot.lane.b32.xlu0 %v646, 18
      %v1190 = vpop.permute.xlu0 %1189
      %1191 = vrot.lane.b32.xlu0 %v650, 18
      %v1192 = vpop.permute.xlu0 %1191
      %vm1193 = vcmask 146432
      %v1194 = vsel %vm1193, %v1190, %v1192
      %v1198 = vmul.f32 %v1183, %v1190
      %v1199 = vmul.f32 %v1184, %v1194
      %v1200 = vmul.f32 %v1185, %v1192
      %v1201 = vmul.f32 %v1186, %v1190
      %v1202 = vmul.f32 %v1187, %v1194
      %v1203 = vmul.f32 %v1188, %v1192
      %v1204 = vpack.c.bf16 %v1201, %v1198
      %v1205 = vpack.c.bf16 %v1202, %v1199
      %v1206 = vpack.c.bf16 %v1203, %v1200
      %1210 = vrot.lane.b32.xlu0 %v1204, 110
      %v1211 = vpop.permute.xlu0 %1210
      %1212 = vrot.lane.b32.xlu0 %v1205, 110
      %v1213 = vpop.permute.xlu0 %1212
      %1214 = vrot.lane.b32.xlu0 %v1206, 110
      %v1215 = vpop.permute.xlu0 %1214
      %vm1216 = vcmask 900096
      %v1217 = vsel %vm1216, %v1211, %v1213
      %v1218 = vsel %vm1216, %v1213, %v1215
      %1221 = vst [vmem:[#allocation3 + $0x130] sm:$0xff] %v1217
      %1222 = vst [vmem:[#allocation3 + $0x138] sm:$0xff] %v1218
      %v1223 = vld [vmem:[#allocation2 + $0x8] sm:$0xff]
      %v1224 = vld [vmem:[#allocation2 + $0x10] sm:$0xff]
      %v1225 = vld [vmem:[#allocation2 + $0x18] sm:$0xff]
      %v1226 = vld [vmem:[#allocation2 + $0x28] sm:$0xff]
      %v1227 = vld [vmem:[#allocation2 + $0x30] sm:$0xff]
      %v1228 = vld [vmem:[#allocation2 + $0x38] sm:$0xff]
      %1229 = vrot.lane.b32.xlu0 %v474, 30
      %v1230 = vpop.permute.xlu0 %1229
      %1231 = vrot.lane.b32.xlu0 %v478, 30
      %v1232 = vpop.permute.xlu0 %1231
      %vm1233 = vcmask 244736
      %v1234 = vsel %vm1233, %v1230, %v1232
      %v1238 = vmul.f32 %v1223, %v1230
      %v1239 = vmul.f32 %v1224, %v1234
      %v1240 = vmul.f32 %v1225, %v1232
      %v1241 = vmul.f32 %v1226, %v1230
      %v1242 = vmul.f32 %v1227, %v1234
      %v1243 = vmul.f32 %v1228, %v1232
      %v1244 = vpack.c.bf16 %v1241, %v1238
      %v1245 = vpack.c.bf16 %v1242, %v1239
      %v1246 = vpack.c.bf16 %v1243, %v1240
      %1250 = vrot.lane.b32.xlu0 %v1244, 98
      %v1251 = vpop.permute.xlu0 %1250
      %1252 = vrot.lane.b32.xlu0 %v1245, 98
      %v1253 = vpop.permute.xlu0 %1252
      %1254 = vrot.lane.b32.xlu0 %v1246, 98
      %v1255 = vpop.permute.xlu0 %1254
      %vm1256 = vcmask 801792
      %v1257 = vsel %vm1256, %v1251, %v1253
      %v1258 = vsel %vm1256, %v1253, %v1255
      %1261 = vst [vmem:[#allocation3 + $0x140] sm:$0xff] %v1257
      %1262 = vst [vmem:[#allocation3 + $0x148] sm:$0xff] %v1258
      %v1263 = vld [vmem:[#allocation2 + $0x8] sm:$0xff]
      %v1264 = vld [vmem:[#allocation2 + $0x10] sm:$0xff]
      %v1265 = vld [vmem:[#allocation2 + $0x18] sm:$0xff]
      %v1266 = vld [vmem:[#allocation2 + $0x28] sm:$0xff]
      %v1267 = vld [vmem:[#allocation2 + $0x30] sm:$0xff]
      %v1268 = vld [vmem:[#allocation2 + $0x38] sm:$0xff]
      %1269 = vrot.lane.b32.xlu0 %v523, 31
      %v1270 = vpop.permute.xlu0 %1269
      %1271 = vrot.lane.b32.xlu0 %v527, 31
      %v1272 = vpop.permute.xlu0 %1271
      %vm1273 = vcmask 252928
      %v1274 = vsel %vm1273, %v1270, %v1272
      %v1278 = vmul.f32 %v1263, %v1270
      %v1279 = vmul.f32 %v1264, %v1274
      %v1280 = vmul.f32 %v1265, %v1272
      %v1281 = vmul.f32 %v1266, %v1270
      %v1282 = vmul.f32 %v1267, %v1274
      %v1283 = vmul.f32 %v1268, %v1272
      %v1284 = vpack.c.bf16 %v1281, %v1278
      %v1285 = vpack.c.bf16 %v1282, %v1279
      %v1286 = vpack.c.bf16 %v1283, %v1280
      %1290 = vrot.lane.b32.xlu0 %v1284, 97
      %v1291 = vpop.permute.xlu0 %1290
      %1292 = vrot.lane.b32.xlu0 %v1285, 97
      %v1293 = vpop.permute.xlu0 %1292
      %1294 = vrot.lane.b32.xlu0 %v1286, 97
      %v1295 = vpop.permute.xlu0 %1294
      %vm1296 = vcmask 793600
      %v1297 = vsel %vm1296, %v1291, %v1293
      %v1298 = vsel %vm1296, %v1293, %v1295
      %1301 = vst [vmem:[#allocation3 + $0x150] sm:$0xff] %v1297
      %1302 = vst [vmem:[#allocation3 + $0x158] sm:$0xff] %v1298
      %v1303 = vld [vmem:[#allocation2 + $0x8] sm:$0xff]
      %v1304 = vld [vmem:[#allocation2 + $0x10] sm:$0xff]
      %v1305 = vld [vmem:[#allocation2 + $0x18] sm:$0xff]
      %v1306 = vld [vmem:[#allocation2 + $0x28] sm:$0xff]
      %v1307 = vld [vmem:[#allocation2 + $0x30] sm:$0xff]
      %v1308 = vld [vmem:[#allocation2 + $0x38] sm:$0xff]
      %v1309 = vpack.c.bf16 %v1306, %v1303
      %v1310 = vpack.c.bf16 %v1307, %v1304
      %v1311 = vpack.c.bf16 %v1308, %v1305
      %1315 = vrot.lane.b32.xlu0 %v1309, 96
      %v1316 = vpop.permute.xlu0 %1315
      %1317 = vrot.lane.b32.xlu0 %v1310, 96
      %v1318 = vpop.permute.xlu0 %1317
      %1319 = vrot.lane.b32.xlu0 %v1311, 96
      %v1320 = vpop.permute.xlu0 %1319
      %vm1321 = vcmask 785408
      %v1322 = vsel %vm1321, %v1316, %v1318
      %v1323 = vsel %vm1321, %v1318, %v1320
      %1326 = vst [vmem:[#allocation3 + $0x160] sm:$0xff] %v1322
      %1327 = vst [vmem:[#allocation3 + $0x168] sm:$0xff] %v1323
      %v1328 = vld [vmem:[#allocation2 + $0x8] sm:$0xff]
      %v1329 = vld [vmem:[#allocation2 + $0x10] sm:$0xff]
      %v1330 = vld [vmem:[#allocation2 + $0x18] sm:$0xff]
      %v1331 = vld [vmem:[#allocation2 + $0x28] sm:$0xff]
      %v1332 = vld [vmem:[#allocation2 + $0x30] sm:$0xff]
      %v1333 = vld [vmem:[#allocation2 + $0x38] sm:$0xff]
      %1334 = vrot.lane.b32.xlu0 %v597, 33
      %v1335 = vpop.permute.xlu0 %1334
      %1336 = vrot.lane.b32.xlu0 %v601, 33
      %v1337 = vpop.permute.xlu0 %1336
      %vm1338 = vcmask 269312
      %v1339 = vsel %vm1338, %v1335, %v1337
      %v1343 = vmul.f32 %v1328, %v1335
      %v1344 = vmul.f32 %v1329, %v1339
      %v1345 = vmul.f32 %v1330, %v1337
      %v1346 = vmul.f32 %v1331, %v1335
      %v1347 = vmul.f32 %v1332, %v1339
      %v1348 = vmul.f32 %v1333, %v1337
      %v1349 = vpack.c.bf16 %v1346, %v1343
      %v1350 = vpack.c.bf16 %v1347, %v1344
      %v1351 = vpack.c.bf16 %v1348, %v1345
      %1355 = vrot.lane.b32.xlu0 %v1349, 95
      %v1356 = vpop.permute.xlu0 %1355
      %1357 = vrot.lane.b32.xlu0 %v1350, 95
      %v1358 = vpop.permute.xlu0 %1357
      %1359 = vrot.lane.b32.xlu0 %v1351, 95
      %v1360 = vpop.permute.xlu0 %1359
      %vm1361 = vcmask 777216
      %v1362 = vsel %vm1361, %v1356, %v1358
      %v1363 = vsel %vm1361, %v1358, %v1360
      %1366 = vst [vmem:[#allocation3 + $0x170] sm:$0xff] %v1362
      %1367 = vst [vmem:[#allocation3 + $0x178] sm:$0xff] %v1363
      %v1368 = vld [vmem:[#allocation2 + $0x8] sm:$0xff]
      %v1369 = vld [vmem:[#allocation2 + $0x10] sm:$0xff]
      %v1370 = vld [vmem:[#allocation2 + $0x18] sm:$0xff]
      %v1371 = vld [vmem:[#allocation2 + $0x28] sm:$0xff]
      %v1372 = vld [vmem:[#allocation2 + $0x30] sm:$0xff]
      %v1373 = vld [vmem:[#allocation2 + $0x38] sm:$0xff]
      %1374 = vrot.lane.b32.xlu0 %v646, 34
      %v1375 = vpop.permute.xlu0 %1374
      %1376 = vrot.lane.b32.xlu0 %v650, 34
      %v1377 = vpop.permute.xlu0 %1376
      %v1378 = vsel %vm447, %v1375, %v1377
      %v1382 = vmul.f32 %v1368, %v1375
      %v1383 = vmul.f32 %v1369, %v1378
      %v1384 = vmul.f32 %v1370, %v1377
      %v1385 = vmul.f32 %v1371, %v1375
      %v1386 = vmul.f32 %v1372, %v1378
      %v1387 = vmul.f32 %v1373, %v1377
      %v1388 = vpack.c.bf16 %v1385, %v1382
      %v1389 = vpack.c.bf16 %v1386, %v1383
      %v1390 = vpack.c.bf16 %v1387, %v1384
      %1394 = vrot.lane.b32.xlu0 %v1388, 94
      %v1395 = vpop.permute.xlu0 %1394
      %1396 = vrot.lane.b32.xlu0 %v1389, 94
      %v1397 = vpop.permute.xlu0 %1396
      %1398 = vrot.lane.b32.xlu0 %v1390, 94
      %v1399 = vpop.permute.xlu0 %1398
      %vm1400 = vcmask 769024
      %v1401 = vsel %vm1400, %v1395, %v1397
      %v1402 = vsel %vm1400, %v1397, %v1399
      %1405 = vst [vmem:[#allocation3 + $0x180] sm:$0xff] %v1401
      %1406 = vst [vmem:[#allocation3 + $0x188] sm:$0xff] %v1402
      %v1407 = vld [vmem:[%s2] sm:$0xff]
      %v1408 = vld [vmem:[#allocation3] sm:$0xff]
      %v1409 = vld [vmem:[#allocation3 + $0x8] sm:$0xff]
      %v1410 = vld [vmem:[#allocation3 + $0x10] sm:$0xff]
      %v1411 = vld [vmem:[#allocation3 + $0x18] sm:$0xff]
      %v1412 = vld [vmem:[#allocation3 + $0x20] sm:$0xff]
      %v1413 = vld [vmem:[#allocation3 + $0x28] sm:$0xff]
      %v1414 = vld [vmem:[#allocation3 + $0x30] sm:$0xff]
      %v1415 = vld [vmem:[#allocation3 + $0x38] sm:$0xff]
      %v1416 = vld [vmem:[#allocation3 + $0x40] sm:$0xff]
      %v1417 = vld [vmem:[#allocation3 + $0x48] sm:$0xff]
      %v1418 = vld [vmem:[#allocation3 + $0x50] sm:$0xff]
      %v1419 = vld [vmem:[#allocation3 + $0x58] sm:$0xff]
      %v1420 = vld [vmem:[#allocation3 + $0x60] sm:$0xff]
      %v1421 = vld [vmem:[#allocation3 + $0x68] sm:$0xff]
      %v1422 = vld [vmem:[#allocation3 + $0x70] sm:$0xff]
      %v1423 = vld [vmem:[#allocation3 + $0x78] sm:$0xff]
      %v1424 = vld [vmem:[#allocation3 + $0x80] sm:$0xff]
      %v1425 = vld [vmem:[#allocation3 + $0x88] sm:$0xff]
      %v1426 = vld [vmem:[#allocation3 + $0x90] sm:$0xff]
      %v1427 = vld [vmem:[#allocation3 + $0x98] sm:$0xff]
      %v1428 = vld [vmem:[#allocation3 + $0xa0] sm:$0xff]
      %v1429 = vld [vmem:[#allocation3 + $0xa8] sm:$0xff]
      %v1430 = vld [vmem:[#allocation3 + $0xb0] sm:$0xff]
      %v1431 = vld [vmem:[#allocation3 + $0xb8] sm:$0xff]
      %v1432 = vld [vmem:[#allocation3 + $0xc0] sm:$0xff]
      %v1433 = vld [vmem:[#allocation3 + $0xc8] sm:$0xff]
      %v1434 = vld [vmem:[#allocation3 + $0xd0] sm:$0xff]
      %v1435 = vld [vmem:[#allocation3 + $0xd8] sm:$0xff]
      %v1436 = vld [vmem:[#allocation3 + $0xe0] sm:$0xff]
      %v1437 = vld [vmem:[#allocation3 + $0xe8] sm:$0xff]
      %v1438 = vld [vmem:[#allocation3 + $0xf0] sm:$0xff]
      %v1439 = vld [vmem:[#allocation3 + $0xf8] sm:$0xff]
      %v1440 = vld [vmem:[#allocation3 + $0x100] sm:$0xff]
      %v1441 = vld [vmem:[#allocation3 + $0x108] sm:$0xff]
      %v1442 = vld [vmem:[#allocation3 + $0x110] sm:$0xff]
      %v1443 = vld [vmem:[#allocation3 + $0x118] sm:$0xff]
      %v1444 = vld [vmem:[#allocation3 + $0x120] sm:$0xff]
      %v1445 = vld [vmem:[#allocation3 + $0x128] sm:$0xff]
      %v1446 = vld [vmem:[#allocation3 + $0x130] sm:$0xff]
      %v1447 = vld [vmem:[#allocation3 + $0x138] sm:$0xff]
      %v1448 = vld [vmem:[#allocation3 + $0x140] sm:$0xff]
      %v1449 = vld [vmem:[#allocation3 + $0x148] sm:$0xff]
      %v1450 = vld [vmem:[#allocation3 + $0x150] sm:$0xff]
      %v1451 = vld [vmem:[#allocation3 + $0x158] sm:$0xff]
      %v1452 = vld [vmem:[#allocation3 + $0x160] sm:$0xff]
      %v1453 = vld [vmem:[#allocation3 + $0x168] sm:$0xff]
      %v1454 = vld [vmem:[#allocation3 + $0x170] sm:$0xff]
      %v1455 = vld [vmem:[#allocation3 + $0x178] sm:$0xff]
      %v1456 = vld [vmem:[#allocation3 + $0x180] sm:$0xff]
      %v1457 = vld [vmem:[#allocation3 + $0x188] sm:$0xff]
      %v1459 = vcombine.high %v1407, %v1407
      %v1461 = vunpack.c.l.s4 1983009808
      %v1462 = vunpack.c.0.s8 %v1461
      %v1463 = vlaneseq
      %v1464 = vshrl.u32 %v1463, 7
      %v1465 = vsub.s32 %v1462, %v1464
      %v1466 = vrot.slane %v1407, %v1465
      %v1468 = vunpack.c.l.s4 1983009808
      %v1469 = vunpack.c.0.s8 %v1468
      %v1470 = vlaneseq
      %v1471 = vshrl.u32 %v1470, 7
      %v1472 = vsub.s32 %v1469, %v1471
      %v1473 = vrot.slane %v1459, %v1472
      %v1474 = vcombine.high %v1466, %v1466
      %v1475 = vcombine.high %v1473, %v1473
      %vm1479 = vcmask 130048
      %v1481 = vsel %vm1479, %v1475, 0
      %1483 = vmatprep.subr.bf16.mxu0 %v1409
      %1484 = vmatpush1.bf16.msra.mxu0 %v1408
      %1485 = vmatprep.subr.bf16.mxu0 %v1411
      %1486 = vmatpush1.bf16.msra.mxu0 %v1410
      %1487 = vmatprep.subr.bf16.mxu0 %v1413
      %1488 = vmatpush1.bf16.msra.mxu0 %v1412
      %1489 = vmatprep.subr.bf16.mxu0 %v1415
      %1490 = vmatpush1.bf16.msra.mxu0 %v1414
      %1491 = vmatprep.subr.bf16.mxu0 %v1417
      %1492 = vmatpush1.bf16.msra.mxu0 %v1416
      %1493 = vmatprep.subr.bf16.mxu0 %v1419
      %1494 = vmatpush1.bf16.msra.mxu0 %v1418
      %1495 = vmatprep.subr.bf16.mxu0 %v1421
      %1496 = vmatpush1.bf16.msra.mxu0 %v1420
      %1497 = vmatprep.subr.bf16.mxu0 %v1423
      %1498 = vmatpush1.bf16.msra.mxu0 %v1422
      %1499 = vmatprep.subr.bf16.mxu0 %v1425
      %1500 = vmatpush1.bf16.msra.mxu0 %v1424
      %1501 = vmatprep.subr.bf16.mxu0 %v1427
      %1502 = vmatpush1.bf16.msra.mxu0 %v1426
      %1503 = vmatprep.subr.bf16.mxu0 %v1429
      %1504 = vmatpush1.bf16.msra.mxu0 %v1428
      %1505 = vmatprep.subr.bf16.mxu0 %v1431
      %1506 = vmatpush1.bf16.msra.mxu0 %v1430
      %1507 = vmatprep.subr.bf16.mxu0 %v1433
      %1508 = vmatpush1.bf16.msra.mxu0 %v1432
      %1509 = vmatprep.subr.bf16.mxu0 %v1435
      %1510 = vmatpush1.bf16.msra.mxu0 %v1434
      %1511 = vmatprep.subr.bf16.mxu0 %v1437
      %1512 = vmatpush1.bf16.msra.mxu0 %v1436
      %1513 = vmatprep.subr.bf16.mxu0 %v1439
      %1514 = vmatpush1.bf16.msra.mxu0 %v1438
      %1515 = vmatprep.mubr.bf16.mxu0 %v1474
      %1516 = vmatmul.mubr.bf16.gmra.mrb[0].mxu0 %v1466
      %v1517 = vpop.f32.mrb[0].mxu0
      %v1518 = vadd.f32 0.0, %v1517
      %v1519 = vpop.f32.mrb[0].mxu0
      %v1520 = vadd.f32 0.0, %v1519
      %v1521 = vpop.f32.mrb[0].mxu0
      %v1522 = vpop.f32.mrb[0].mxu0
      %1523 = vdwg.mxu0
      %1524 = vmatprep.subr.bf16.mxu0 %v1441
      %1525 = vmatpush1.bf16.msra.mxu0 %v1440
      %1526 = vmatprep.subr.bf16.mxu0 %v1443
      %1527 = vmatpush1.bf16.msra.mxu0 %v1442
      %1528 = vmatprep.subr.bf16.mxu0 %v1445
      %1529 = vmatpush1.bf16.msra.mxu0 %v1444
      %1530 = vmatprep.subr.bf16.mxu0 %v1447
      %1531 = vmatpush1.bf16.msra.mxu0 %v1446
      %1532 = vmatprep.subr.bf16.mxu0 %v1449
      %1533 = vmatpush1.bf16.msra.mxu0 %v1448
      %1534 = vmatprep.subr.bf16.mxu0 %v1451
      %1535 = vmatpush1.bf16.msra.mxu0 %v1450
      %1536 = vmatprep.subr.bf16.mxu0 %v1453
      %1537 = vmatpush1.bf16.msra.mxu0 %v1452
      %1538 = vmatprep.subr.bf16.mxu0 %v1455
      %1539 = vmatpush1.bf16.msra.mxu0 %v1454
      %1540 = vmatprep.subr.bf16.mxu0 %v1457
      %1541 = vmatpush1.bf16.msra.mxu0 %v1456
      %1542 = vmatprep.subr.bf16.mxu0 0
      %1543 = vmatpush1.bf16.msra.mxu0 0
      %1544 = vmatprep.subr.bf16.mxu0 0
      %1545 = vmatpush1.bf16.msra.mxu0 0
      %1546 = vmatprep.subr.bf16.mxu0 0
      %1547 = vmatpush1.bf16.msra.mxu0 0
      %1548 = vmatprep.subr.bf16.mxu0 0
      %1549 = vmatpush1.bf16.msra.mxu0 0
      %1550 = vmatprep.subr.bf16.mxu0 0
      %1551 = vmatpush1.bf16.msra.mxu0 0
      %1552 = vmatprep.subr.bf16.mxu0 0
      %1553 = vmatpush1.bf16.msra.mxu0 0
      %1554 = vmatprep.subr.bf16.mxu0 0
      %1555 = vmatpush1.bf16.msra.mxu0 0
      %1556 = vmatprep.mubr.bf16.mxu0 %v1481
      %1557 = vmatmul.mubr.bf16.gmra.mrb[0].mxu0 %v1473
      %v1558 = vpop.f32.mrb[0].mxu0
      %v1559 = vadd.f32 %v1518, %v1558
      %v1560 = vpop.f32.mrb[0].mxu0
      %v1561 = vadd.f32 %v1520, %v1560
      %v1562 = vpop.f32.mrb[0].mxu0
      %v1563 = vpop.f32.mrb[0].mxu0
      %1564 = vdwg.mxu0
      %v1567 = vrot.slane %v1559, 4
      %v1568 = vrot.slane %v1561, 4
      %1571 = vst [vmem:[%s305] sm:$0xf0] %v1567
      %1572 = vst [vmem:[%s305 + $0x8] sm:$0xf0] %v1568
      %p1573 = scmp.lt.s32.totalorder %s19, 1
      %s1574 = scalar_select %p1573, %s19, 1
      %s1575 = smul.addr %s1574, 2
      %s1576 = smul.addr %s1575, 8
      %s1577 = scalar_lea.vmem %s8, %s1576
      // Predicated region
      $region53: #{bottleneck_block1.1} parent=51 // pred_check
        %p1578 = pneg %p210
      $region54: #{bottleneck_block1.1} parent=51 // pred_check_branch
        %1580 = sbr.rel (%p1578) target = $region56
      $region55: #{bottleneck_block1.1} parent=51 // pred_region
        _
      $region56: #{bottleneck_block1.1} parent=51 // pred_fallthru
        _
    $region52: #{bottleneck_block1.1} parent=5 // pred_fallthru
      _
    %p1581 = scmp.le.s32.totalorder 2, %s14
    // Predicated region
    $region57: #{bottleneck_block1.1} parent=5 // pred_check
      %p1582 = pneg %p1581
    $region58: #{bottleneck_block1.1} parent=5 // pred_check_branch
      %1584 = sbr.rel (%p1582) target = $region60
    $region59: #{bottleneck_block1.1} parent=5 // pred_region
      %s1585 = ssub.s32 %s14, 2
      // Predicated region
      $region61: #{bottleneck_block1.1} parent=59 // pred_check
        %p1586 = pneg %p216
      $region62: #{bottleneck_block1.1} parent=59 // pred_check_branch
        %1588 = sbr.rel (%p1586) target = $region64
      $region63: #{bottleneck_block1.1} parent=59 // pred_region
        %p1589 = scmp.lt.s32.totalorder %s20, 1
        %s1590 = scalar_select %p1589, %s20, 1
        %s1591 = smul.addr %s1590, 2
        %s1592 = smul.addr %s1591, 8
        %s1593 = scalar_lea.vmem %s8, %s1592
      $region64: #{bottleneck_block1.1} parent=59 // pred_fallthru
        _
    $region60: #{bottleneck_block1.1} parent=5 // pred_fallthru
      _
  $region6: #{bottleneck_block1.1} parent=0 // loop_footer
    %s18 = sadd.s32 1, %s14
  $region7: #{bottleneck_block1.1} parent=0 // loop_footer_branch
    %13 = sbr.rel target = $region3
  $region8: #{bottleneck_block1.1} parent=0 // loop_exit
    _

</llo_original>
